<compile_context>
chip_gen: v7x
topology: tpu7x:2x2x1
jax: 0.10.0
libtpu: 0.0.40
codegen_flags: <defaults>
</compile_context>

<pallas_src>
import functools

import jax
import jax.numpy as jnp
from jax.experimental import pallas as pl
from jax.experimental.pallas import tpu as pltpu


def _forward_op_kernel(x_ref, fw_ref, fh_ref, m_ref, y_ref):
    """One grid step: TB images, each (H, W) complex, stored as [re | im] lanes."""
    TB, H, W2 = x_ref.shape
    W = W2 // 2

    # ---- Stage 1: DFT along W — one fused complex matmul, M = TB*H ----------
    x = x_ref[...].reshape(TB * H, 2 * W)                     # [Xr | Xi]
    t = jnp.dot(x, fw_ref[...],
                preferred_element_type=jnp.float32)           # [Tr | Ti]  (TB*H, 2W)

    # ---- Per-image H<->W transpose (batched minor transposes; XLU overlaps MXU)
    tr = jnp.swapaxes(t[:, :W].reshape(TB, H, W), -2, -1)     # (TB, W, H)
    ti = jnp.swapaxes(t[:, W:].reshape(TB, H, W), -2, -1)     # (TB, W, H)

    # ---- Stage 2: DFT along H — one fused complex matmul, M = TB*W ----------
    a2 = jnp.concatenate([tr, ti], axis=-1).reshape(TB * W, 2 * H)
    a2 = a2.astype(fh_ref.dtype)                              # bf16 path: keep MXU native
    z = jnp.dot(a2, fh_ref[...],
                preferred_element_type=jnp.float32)           # [Yr^T | Yi^T]  (TB*W, 2H)

    # ---- Transpose back; store masked halves straight into the output lanes.
    m = m_ref[...][None]                                      # (1, H, W)
    yr = jnp.swapaxes(z[:, :H].reshape(TB, W, H), -2, -1)     # (TB, H, W)
    yi = jnp.swapaxes(z[:, H:].reshape(TB, W, H), -2, -1)     # (TB, H, W)
    y_ref[:, :, :W] = yr * m
    y_ref[:, :, W:] = yi * m


def _ortho_dft_block(n):
    """Block-real form of the n-point orthonormal DFT matrix, shape (2n, 2n).

    [Xr | Xi] @ blk = [Yr | Yi]  with  Y = X @ F,  F[j,k] = exp(-2i*pi*j*k/n)/sqrt(n).
    Phase is reduced mod n in integer math before scaling, so it stays accurate
    for large n (f32 rounding of j*k would otherwise corrupt the phases).
    NOTE: int32 outer product overflows for n >= ~46342; far above realistic
    image sizes for a dense-DFT formulation.
    """
    idx = jnp.arange(n, dtype=jnp.int32)
    phase = (idx[:, None] * idx[None, :]) % n
    ang = (-2.0 * jnp.pi / n) * phase.astype(jnp.float32)
    s = jnp.float32(1.0) / jnp.sqrt(jnp.float32(n))
    fr = jnp.cos(ang) * s
    fi = jnp.sin(ang) * s
    top = jnp.concatenate([fr, fi], axis=1)
    bot = jnp.concatenate([-fi, fr], axis=1)
    return jnp.concatenate([top, bot], axis=0)


def _vmem_limit_bytes():
    """Scoped VMEM budget: ~3/4 of physical, capped at 96 MiB (48 MiB on v7x)."""
    try:
        phys = int(pltpu.get_tpu_info().vmem_capacity_bytes)
    except Exception:
        phys = 64 << 20            # conservative fallback (v7x physical per TC)
    return int(min((phys * 3) // 4, 96 << 20))


def _pick_tile_batch(n, h, w, vmem_limit, use_bf16):
    """Images per grid step, sized against a ~12-slab live-footprint model."""
    itemsize = 2 if use_bf16 else 4
    slab_in = h * 2 * w * itemsize          # one input image tile
    slab_f32 = h * 2 * w * 4                # output / intermediates are f32
    # Constants (DFT block matrices + mask), double-buffered by the pipeline.
    const_bytes = ((2 * w) * (2 * w) + (2 * h) * (2 * h)) * itemsize * 2 + h * w * 4 * 2
    budget = vmem_limit - const_bytes - (4 << 20)   # headroom for compiler scratch
    # Live per step ~= 2 in-buffers + 2 out-buffers + ~8 f32 intermediates
    # (t, slices, tr/ti, a2, z, z-slices, yr/yi, masked products).
    per_image = 2 * slab_in + (2 + 8) * slab_f32
    cap = max(1, budget // per_image)

    if max(h, w) <= 64:
        # Small images: per-grid-step overhead dominates; maximize images/step.
        tb_cap = cap
    else:
        # Keep >= 4 grid steps so both v7x TensorCores get >= 2 steps each and
        # the per-tile DMA hides behind the stage-1/stage-2 matmuls.
        tb_cap = min(cap, 128, -(-n // 4))
    tb_cap = int(max(1, min(tb_cap, n)))

    # Prefer a tile that divides N (skips the whole-slab jnp.pad HBM pass)
    # unless the best divisor is far below the VMEM-derived cap.
    best = 1
    for tb in range(tb_cap, 0, -1):
        if n % tb == 0:
            best = tb
            break
    return best if 2 * best > tb_cap else tb_cap


@functools.partial(jax.jit, static_argnames=("tile_batch", "use_bf16"))
def forward_op(image, mask, tile_batch=None, use_bf16=False):
    """image: complex64 (B, C, H, W); mask: (H, W). Returns complex64 (B, C, H, W)."""
    B, C, H, W = image.shape
    N = B * C
    vmem_limit = _vmem_limit_bytes()

    if tile_batch is None:
        TB = _pick_tile_batch(N, H, W, vmem_limit, use_bf16)
    else:
        TB = max(1, min(int(tile_batch), N))
    G = pl.cdiv(N, TB)
    Np = G * TB

    in_dtype = jnp.bfloat16 if use_bf16 else jnp.float32

    # Single real input slab: real/imag stacked along lanes -> (N, H, 2W).
    x = jnp.concatenate(
        [jnp.real(image), jnp.imag(image)], axis=-1
    ).astype(in_dtype).reshape(N, H, 2 * W)
    if Np != N:
        # Rare: only when no acceptable divisor of N fits the VMEM cap.
        x = jnp.pad(x, ((0, Np - N), (0, 0), (0, 0)))

    m = mask.astype(jnp.float32)                  # matches torch complex_scale cast

    fw_blk = _ortho_dft_block(W).astype(in_dtype)   # (2W, 2W): contracts over W
    fh_blk = _ortho_dft_block(H).astype(in_dtype)   # (2H, 2H): contracts over H

    const2d = lambda shape: pl.BlockSpec(shape, lambda g: (0, 0))
    per_tile = pl.BlockSpec((TB, H, 2 * W), lambda g: (g, 0, 0))

    y = pl.pallas_call(
        _forward_op_kernel,
        out_shape=jax.ShapeDtypeStruct((Np, H, 2 * W), jnp.float32),
        grid_spec=pltpu.PrefetchScalarGridSpec(
            num_scalar_prefetch=0,
            grid=(G,),
            in_specs=[
                per_tile,                          # x: batched images, [re | im] lanes
                const2d((2 * W, 2 * W)),           # F_W block matrix
                const2d((2 * H, 2 * H)),           # F_H block matrix
                const2d((H, W)),                   # k-space mask
            ],
            out_specs=per_tile,
        ),
        compiler_params=pltpu.CompilerParams(
            dimension_semantics=("parallel",),
            vmem_limit_bytes=vmem_limit),
    )(x, fw_blk, fh_blk, m)

    y = y[:N]
    out = jax.lax.complex(y[..., :W], y[..., W:])
    return out.reshape(B, C, H, W)


if __name__ == "__main__":
    B, C, H, W = 2, 4, 16, 16
    key = jax.random.PRNGKey(0)
    k1, k2, k3 = jax.random.split(key, 3)

    image = (jax.random.normal(k1, (B, C, H, W), dtype=jnp.float32)
             + 1j * jax.random.normal(k2, (B, C, H, W), dtype=jnp.float32)
             ).astype(jnp.complex64)
    # Binary undersampling mask over k-space, shape (H, W).
    mask = (jax.random.uniform(k3, (H, W)) > 0.5).astype(jnp.float32)

    out = jax.block_until_ready(forward_op(image, mask))

    # Reference: same semantics as torch.fft.fft2(norm='ortho') + complex_scale.
    ref = jnp.fft.fft2(image, norm="ortho") * mask.astype(jnp.complex64)
    err = jnp.max(jnp.abs(out - ref))
    assert err < 1e-3, f"mismatch vs reference FFT2+mask: {err}"

    print("KERNEL_OK")
</pallas_src>

<mosaic_0001>
module attributes {stable_mosaic.version = 11 : i64} {
  func.func @_forward_op_kernel(%arg0: i32, %arg1: memref<8x16x32xf32, #tpu.memory_space<vmem>>, %arg2: memref<32x32xf32, #tpu.memory_space<vmem>>, %arg3: memref<32x32xf32, #tpu.memory_space<vmem>>, %arg4: memref<16x16xf32, #tpu.memory_space<vmem>>, %arg5: memref<8x16x32xf32, #tpu.memory_space<vmem>>) attributes {dimension_semantics = [#tpu.dimension_semantics<parallel>], iteration_bounds = array<i64: 1>, scalar_prefetch = 0 : i64, scratch_operands = 0 : i64, tpu.core_type = #tpu.core_type<tc>, window_params = [{transform_indices = @transform_0, window_bounds = array<i64: 8, 16, 32>}, {pipeline_mode = #tpu.pipeline_mode<synchronous>, transform_indices = @transform_1, window_bounds = array<i64: 32, 32>}, {pipeline_mode = #tpu.pipeline_mode<synchronous>, transform_indices = @transform_2, window_bounds = array<i64: 32, 32>}, {pipeline_mode = #tpu.pipeline_mode<synchronous>, transform_indices = @transform_3, window_bounds = array<i64: 16, 16>}, {transform_indices = @transform_4, window_bounds = array<i64: 8, 16, 32>}]} {
    %c0 = arith.constant 0 : index
    %c0_0 = arith.constant 0 : index
    %c0_1 = arith.constant 0 : index
    %0 = vector.load %arg1[%c0, %c0_0, %c0_1] : memref<8x16x32xf32, #tpu.memory_space<vmem>>, vector<8x16x32xf32>
    %1 = vector.shape_cast %0 : vector<8x16x32xf32> to vector<128x32xf32>
    %c0_2 = arith.constant 0 : index
    %c0_3 = arith.constant 0 : index
    %2 = vector.load %arg2[%c0_2, %c0_3] : memref<32x32xf32, #tpu.memory_space<vmem>>, vector<32x32xf32>
    %cst = arith.constant dense<0.000000e+00> : vector<128x32xf32>
    %3 = tpu.matmul %1, %2, %cst {dimension_numbers = #tpu.dot_dimension_numbers<[1], [0], [0], [1], [0, 0, 1, 1], [], []>} : vector<128x32xf32>, vector<32x32xf32>, vector<128x32xf32> -> vector<128x32xf32>
    %4 = vector.extract_strided_slice %3 {offsets = [0, 0], sizes = [128, 16], strides = [1, 1]} : vector<128x32xf32> to vector<128x16xf32>
    %5 = vector.shape_cast %4 : vector<128x16xf32> to vector<8x16x16xf32>
    %6 = tpu.transpose %5, [0, 2, 1] : vector<8x16x16xf32> -> vector<8x16x16xf32>
    %7 = vector.extract_strided_slice %3 {offsets = [0, 16], sizes = [128, 16], strides = [1, 1]} : vector<128x32xf32> to vector<128x16xf32>
    %8 = vector.shape_cast %7 : vector<128x16xf32> to vector<8x16x16xf32>
    %9 = tpu.transpose %8, [0, 2, 1] : vector<8x16x16xf32> -> vector<8x16x16xf32>
    %10 = tpu.concatenate %6, %9 in 2 : vector<8x16x16xf32>, vector<8x16x16xf32> -> vector<8x16x32xf32>
    %11 = vector.shape_cast %10 : vector<8x16x32xf32> to vector<128x32xf32>
    %c0_4 = arith.constant 0 : index
    %c0_5 = arith.constant 0 : index
    %12 = vector.load %arg3[%c0_4, %c0_5] : memref<32x32xf32, #tpu.memory_space<vmem>>, vector<32x32xf32>
    %cst_6 = arith.constant dense<0.000000e+00> : vector<128x32xf32>
    %13 = tpu.matmul %11, %12, %cst_6 {dimension_numbers = #tpu.dot_dimension_numbers<[1], [0], [0], [1], [0, 0, 1, 1], [], []>} : vector<128x32xf32>, vector<32x32xf32>, vector<128x32xf32> -> vector<128x32xf32>
    %c0_7 = arith.constant 0 : index
    %c0_8 = arith.constant 0 : index
    %14 = vector.load %arg4[%c0_7, %c0_8] : memref<16x16xf32, #tpu.memory_space<vmem>>, vector<16x16xf32>
    %15 = vector.shape_cast %14 : vector<16x16xf32> to vector<1x16x16xf32>
    %16 = vector.extract_strided_slice %13 {offsets = [0, 0], sizes = [128, 16], strides = [1, 1]} : vector<128x32xf32> to vector<128x16xf32>
    %17 = vector.shape_cast %16 : vector<128x16xf32> to vector<8x16x16xf32>
    %18 = tpu.transpose %17, [0, 2, 1] : vector<8x16x16xf32> -> vector<8x16x16xf32>
    %19 = vector.extract_strided_slice %13 {offsets = [0, 16], sizes = [128, 16], strides = [1, 1]} : vector<128x32xf32> to vector<128x16xf32>
    %20 = vector.shape_cast %19 : vector<128x16xf32> to vector<8x16x16xf32>
    %21 = tpu.transpose %20, [0, 2, 1] : vector<8x16x16xf32> -> vector<8x16x16xf32>
    %22 = vector.broadcast %15 : vector<1x16x16xf32> to vector<8x16x16xf32>
    %23 = arith.mulf %18, %22 : vector<8x16x16xf32>
    %c0_9 = arith.constant 0 : index
    %c0_10 = arith.constant 0 : index
    %c0_11 = arith.constant 0 : index
    %24 = vector.load %arg5[%c0_9, %c0_10, %c0_11] : memref<8x16x32xf32, #tpu.memory_space<vmem>>, vector<8x16x16xf32>
    tpu.vector_store %arg5[%c0_9, %c0_10, %c0_11], %23 {strides = array<i32>} : memref<8x16x32xf32, #tpu.memory_space<vmem>>, vector<8x16x16xf32>,
    %25 = vector.broadcast %15 : vector<1x16x16xf32> to vector<8x16x16xf32>
    %26 = arith.mulf %21, %25 : vector<8x16x16xf32>
    %c0_12 = arith.constant 0 : index
    %c0_13 = arith.constant 0 : index
    %c16 = arith.constant 16 : index
    %27 = vector.load %arg5[%c0_12, %c0_13, %c16] : memref<8x16x32xf32, #tpu.memory_space<vmem>>, vector<8x16x16xf32>
    tpu.vector_store %arg5[%c0_12, %c0_13, %c16], %26 {strides = array<i32>} : memref<8x16x32xf32, #tpu.memory_space<vmem>>, vector<8x16x16xf32>,
    return
  }
  func.func @transform_0(%arg0: i32) -> (i32, i32, i32) {
    %c0_i32 = arith.constant 0 : i32
    %c0_i32_0 = arith.constant 0 : i32
    %c0_i32_1 = arith.constant 0 : i32
    return %arg0, %c0_i32, %c0_i32_0 : i32, i32, i32
  }
  func.func @transform_1(%arg0: i32) -> (i32, i32) {
    %c0_i32 = arith.constant 0 : i32
    %c0_i32_0 = arith.constant 0 : i32
    %c0_i32_1 = arith.constant 0 : i32
    return %c0_i32, %c0_i32_0 : i32, i32
  }
  func.func @transform_2(%arg0: i32) -> (i32, i32) {
    %c0_i32 = arith.constant 0 : i32
    %c0_i32_0 = arith.constant 0 : i32
    %c0_i32_1 = arith.constant 0 : i32
    return %c0_i32, %c0_i32_0 : i32, i32
  }
  func.func @transform_3(%arg0: i32) -> (i32, i32) {
    %c0_i32 = arith.constant 0 : i32
    %c0_i32_0 = arith.constant 0 : i32
    %c0_i32_1 = arith.constant 0 : i32
    return %c0_i32, %c0_i32_0 : i32, i32
  }
  func.func @transform_4(%arg0: i32) -> (i32, i32, i32) {
    %c0_i32 = arith.constant 0 : i32
    %c0_i32_0 = arith.constant 0 : i32
    %c0_i32_1 = arith.constant 0 : i32
    return %arg0, %c0_i32, %c0_i32_0 : i32, i32, i32
  }
}

</mosaic_0001>

<llo_original>
// kernel: custom-call.1
$region0: #{custom-call.1}
  %s0 = inlined_call_operand.hbm [shape: c64[2,4,16,16], index: 0, kind: input, shape index: {}]
  %s1 = inlined_call_operand.vmem [shape: f32[2,4,16,16], index: 1, kind: output, shape index: {}]
  %s2 = scalar_lea.hbm %s0, 2048
  $region1: #{custom-call.1} parent=0
    #allocation0 [shape = 's32[1]{0}', space=sflag, size = 0x4, scoped, tag = 'scoped memory for custom-call.1']
    %3 = vsyncpa [#allocation0], 0
    %s4 = sshll.u32 %s1, 4
    %s5 = int_to_ptr.vmem [resolvable:$true] %s4
    %7 = dma.hbm_to_vmem [thread:$0]  %s2, 2048, %s5, [#allocation0]
    %8 = dma.done [#allocation0], 2048
    %9 = vsyncpa [#allocation0], 1

// kernel: custom-call
$region0: #{custom-call}
  %s0 = inlined_call_operand.hbm [shape: c64[2,4,16,16], index: 0, kind: input, shape index: {}]
  %s1 = inlined_call_operand.vmem [shape: f32[2,4,16,16], index: 1, kind: output, shape index: {}]
  $region1: #{custom-call} parent=0
    #allocation0 [shape = 's32[1]{0}', space=sflag, size = 0x4, scoped, tag = 'scoped memory for custom-call']
    %2 = vsyncpa [#allocation0], 0
    %s3 = sshll.u32 %s1, 4
    %s4 = int_to_ptr.vmem [resolvable:$true] %s3
    %6 = dma.hbm_to_vmem [thread:$0]  %s0, 2048, %s4, [#allocation0]
    %7 = dma.done [#allocation0], 2048
    %8 = vsyncpa [#allocation0], 1

// kernel: custom-call.2
$region0: #{custom-call.2}
  %s0 = inlined_call_operand.vmem [shape: f32[2,4,16,16], index: 0, kind: input, shape index: {}]
  %s1 = inlined_call_operand.vmem [shape: f32[2,4,16,16], index: 1, kind: input, shape index: {}]
  %s2 = inlined_call_operand.hbm [shape: c64[2,4,16,16], index: 2, kind: output, shape index: {}]
  %s3 = scalar_lea.hbm %s2, 2048
  $region1: #{custom-call.2} parent=0
    #allocation0 [shape = 's32[1]{0}', space=sflag, size = 0x4, scoped, tag = 'scoped memory for custom-call.2']
    %4 = vsyncpa [#allocation0], 0
    %s5 = sshll.u32 %s0, 4
    %s6 = int_to_ptr.vmem [resolvable:$true] %s5
    %8 = dma.vmem_to_hbm [thread:$0]  %s6, 2048, %s2, [#allocation0]
    %9 = dma.done [#allocation0], 2048
    %10 = vsyncpa [#allocation0], 1
  $region2: #{custom-call.2} parent=0
    #allocation1 [shape = 's32[1]{0}', space=sflag, size = 0x4, scoped, tag = 'scoped memory for custom-call.2']
    %11 = vsyncpa [#allocation1], 0
    %s12 = sshll.u32 %s1, 4
    %s13 = int_to_ptr.vmem [resolvable:$true] %s12
    %15 = dma.vmem_to_hbm [thread:$0]  %s13, 2048, %s3, [#allocation1]
    %16 = dma.done [#allocation1], 2048
    %17 = vsyncpa [#allocation1], 1

// kernel: forward_op.1
$region0: #{forward_op.1}
  #allocation0 [shape = 'u32[]', space=smem, size = 0x4, offset = 0x4, fixed_abs, tag = 'smem constant byte address 0x4 - core index']
  #allocation1 [shape = 'u32[144,128]{1,0:T(1,128)}', space=vmem, size = 0x12000, scoped, tag = 'internal scratch']
  %s0 = inlined_call_operand.vmem [shape: f32[8,16,32], index: 0, kind: input, shape index: {}]
  %s1 = inlined_call_operand.vmem [shape: f32[32,32], index: 1, kind: input, shape index: {}, may-alias: {1,2}]
  %s2 = inlined_call_operand.vmem [shape: f32[32,32], index: 2, kind: input, shape index: {}, may-alias: {1,2}]
  %s3 = inlined_call_operand.vmem [shape: f32[16,16], index: 3, kind: input, shape index: {}]
  %s4 = inlined_call_operand.vmem [shape: f32[8,16,32], index: 4, kind: output, shape index: {}]
  %s5 = sld [smem:[#allocation0]]
  $region26: #{forward_op.1} parent=0
    _
  %s7 = ssub.s32 1, %s5
  %s8 = scalar_select 0, %s7, %s5
  // Predicated region
  $region2: #{forward_op.1} parent=0 // pred_check
    _
  $region3: #{forward_op.1} parent=0 // pred_check_branch
    %10 = sbr.rel (0) target = $region5
  $region4: #{forward_op.1} parent=0 // pred_region
    _
  $region5: #{forward_op.1} parent=0 // pred_fallthru
    _
  // Predicated region
  $region6: #{forward_op.1} parent=0 // pred_check
    _
  $region7: #{forward_op.1} parent=0 // pred_check_branch
    %12 = sbr.rel (0) target = $region9
  $region8: #{forward_op.1} parent=0 // pred_region
    _
  $region9: #{forward_op.1} parent=0 // pred_fallthru
    _
  // Predicated region
  $region10: #{forward_op.1} parent=0 // pred_check
    _
  $region11: #{forward_op.1} parent=0 // pred_check_branch
    %14 = sbr.rel (0) target = $region13
  $region12: #{forward_op.1} parent=0 // pred_region
    _
  $region13: #{forward_op.1} parent=0 // pred_fallthru
    _
  // Predicated region
  $region14: #{forward_op.1} parent=0 // pred_check
    _
  $region15: #{forward_op.1} parent=0 // pred_check_branch
    %16 = sbr.rel (0) target = $region17
  $region16: #{forward_op.1} parent=0 // pred_region
    _
  $region17: #{forward_op.1} parent=0 // pred_fallthru
    _
  %v17 = vld [vmem:[%s0] sm:$0xff]
  %v18 = vld [vmem:[%s0 + $0x8] sm:$0xff]
  %v19 = vld [vmem:[%s0 + $0x10] sm:$0xff]
  %v20 = vld [vmem:[%s0 + $0x18] sm:$0xff]
  %v21 = vld [vmem:[%s0 + $0x20] sm:$0xff]
  %v22 = vld [vmem:[%s0 + $0x28] sm:$0xff]
  %v23 = vld [vmem:[%s0 + $0x30] sm:$0xff]
  %v24 = vld [vmem:[%s0 + $0x38] sm:$0xff]
  %v25 = vld [vmem:[%s0 + $0x40] sm:$0xff]
  %v26 = vld [vmem:[%s0 + $0x48] sm:$0xff]
  %v27 = vld [vmem:[%s0 + $0x50] sm:$0xff]
  %v28 = vld [vmem:[%s0 + $0x58] sm:$0xff]
  %v29 = vld [vmem:[%s0 + $0x60] sm:$0xff]
  %v30 = vld [vmem:[%s0 + $0x68] sm:$0xff]
  %v31 = vld [vmem:[%s0 + $0x70] sm:$0xff]
  %v32 = vld [vmem:[%s0 + $0x78] sm:$0xff]
  %v33 = vld [vmem:[%s1] sm:$0xff]
  %v34 = vld [vmem:[%s1 + $0x8] sm:$0xff]
  %v35 = vld [vmem:[%s1 + $0x10] sm:$0xff]
  %v36 = vld [vmem:[%s1 + $0x18] sm:$0xff]
  %vm37 = vcmask 261120
  %v39 = vsel %vm37, %v17, 0
  %v42 = vsel %vm37, %v18, 0
  %v45 = vsel %vm37, %v19, 0
  %v48 = vsel %vm37, %v20, 0
  %v51 = vsel %vm37, %v21, 0
  %v54 = vsel %vm37, %v22, 0
  %v57 = vsel %vm37, %v23, 0
  %v60 = vsel %vm37, %v24, 0
  %v63 = vsel %vm37, %v25, 0
  %v66 = vsel %vm37, %v26, 0
  %v69 = vsel %vm37, %v27, 0
  %v72 = vsel %vm37, %v28, 0
  %v75 = vsel %vm37, %v29, 0
  %v78 = vsel %vm37, %v30, 0
  %v81 = vsel %vm37, %v31, 0
  %v84 = vsel %vm37, %v32, 0
  %86 = vmatprep.subr.mxu0 0.0
  %87 = vmatpush1.msra.mxu0 %v33
  %88 = vmatprep.subr.mxu0 0.0
  %89 = vmatpush1.msra.mxu0 %v34
  %90 = vmatprep.subr.mxu0 0.0
  %91 = vmatpush1.msra.mxu0 %v35
  %92 = vmatprep.subr.mxu0 0.0
  %93 = vmatpush1.msra.mxu0 %v36
  %94 = vmatprep.subr.mxu0 0.0
  %95 = vmatpush1.msra.mxu0 0.0
  %96 = vmatprep.subr.mxu0 0.0
  %97 = vmatpush1.msra.mxu0 0.0
  %98 = vmatprep.subr.mxu0 0.0
  %99 = vmatpush1.msra.mxu0 0.0
  %100 = vmatprep.subr.mxu0 0.0
  %101 = vmatpush1.msra.mxu0 0.0
  %102 = vmatprep.subr.mxu0 0.0
  %103 = vmatpush1.msra.mxu0 0.0
  %104 = vmatprep.subr.mxu0 0.0
  %105 = vmatpush1.msra.mxu0 0.0
  %106 = vmatprep.subr.mxu0 0.0
  %107 = vmatpush1.msra.mxu0 0.0
  %108 = vmatprep.subr.mxu0 0.0
  %109 = vmatpush1.msra.mxu0 0.0
  %110 = vmatprep.subr.mxu0 0.0
  %111 = vmatpush1.msra.mxu0 0.0
  %112 = vmatprep.subr.mxu0 0.0
  %113 = vmatpush1.msra.mxu0 0.0
  %114 = vmatprep.subr.mxu0 0.0
  %115 = vmatpush1.msra.mxu0 0.0
  %116 = vmatprep.subr.mxu0 0.0
  %117 = vmatpush1.msra.mxu0 0.0
  %118 = vmatprep.subr.mxu0 0.0
  %119 = vmatpush1.msra.mxu0 0.0
  %120 = vmatprep.subr.mxu0 0.0
  %121 = vmatpush1.msra.mxu0 0.0
  %122 = vmatprep.subr.mxu0 0.0
  %123 = vmatpush1.msra.mxu0 0.0
  %124 = vmatprep.subr.mxu0 0.0
  %125 = vmatpush1.msra.mxu0 0.0
  %126 = vmatprep.subr.mxu0 0.0
  %127 = vmatpush1.msra.mxu0 0.0
  %128 = vmatprep.subr.mxu0 0.0
  %129 = vmatpush1.msra.mxu0 0.0
  %130 = vmatprep.subr.mxu0 0.0
  %131 = vmatpush1.msra.mxu0 0.0
  %132 = vmatprep.subr.mxu0 0.0
  %133 = vmatpush1.msra.mxu0 0.0
  %134 = vmatprep.subr.mxu0 0.0
  %135 = vmatpush1.msra.mxu0 0.0
  %136 = vmatprep.subr.mxu0 0.0
  %137 = vmatpush1.msra.mxu0 0.0
  %138 = vmatprep.subr.mxu0 0.0
  %139 = vmatpush1.msra.mxu0 0.0
  %140 = vmatprep.subr.mxu0 0.0
  %141 = vmatpush1.msra.mxu0 0.0
  %142 = vmatprep.subr.mxu0 0.0
  %143 = vmatpush1.msra.mxu0 0.0
  %144 = vmatprep.subr.mxu0 0.0
  %145 = vmatpush1.msra.mxu0 0.0
  %146 = vmatprep.subr.mxu0 0.0
  %147 = vmatpush1.msra.mxu0 0.0
  %148 = vmatprep.subr.mxu0 0.0
  %149 = vmatpush1.msra.mxu0 0.0
  %150 = vmatprep.mubr.f32.mxu0 0.0
  %151 = vmatmul.mubr.f32.gmra.mrb[0].mxu0 %v39
  %v152 = vpop.f32.mrb[0].mxu0
  %v153 = vadd.f32 0.0, %v152
  %v154 = vpop.f32.mrb[0].mxu0
  %155 = vmatprep.mubr.f32.mxu0 0.0
  %156 = vmatmul.mubr.f32.gmra.mrb[0].mxu0 %v42
  %v157 = vpop.f32.mrb[0].mxu0
  %v158 = vadd.f32 0.0, %v157
  %v159 = vpop.f32.mrb[0].mxu0
  %160 = vmatprep.mubr.f32.mxu0 0.0
  %161 = vmatmul.mubr.f32.gmra.mrb[0].mxu0 %v45
  %v162 = vpop.f32.mrb[0].mxu0
  %v163 = vadd.f32 0.0, %v162
  %v164 = vpop.f32.mrb[0].mxu0
  %165 = vmatprep.mubr.f32.mxu0 0.0
  %166 = vmatmul.mubr.f32.gmra.mrb[0].mxu0 %v48
  %v167 = vpop.f32.mrb[0].mxu0
  %v168 = vadd.f32 0.0, %v167
  %v169 = vpop.f32.mrb[0].mxu0
  %170 = vmatprep.mubr.f32.mxu0 0.0
  %171 = vmatmul.mubr.f32.gmra.mrb[0].mxu0 %v51
  %v172 = vpop.f32.mrb[0].mxu0
  %v173 = vadd.f32 0.0, %v172
  %v174 = vpop.f32.mrb[0].mxu0
  %175 = vmatprep.mubr.f32.mxu0 0.0
  %176 = vmatmul.mubr.f32.gmra.mrb[0].mxu0 %v54
  %v177 = vpop.f32.mrb[0].mxu0
  %v178 = vadd.f32 0.0, %v177
  %v179 = vpop.f32.mrb[0].mxu0
  %180 = vmatprep.mubr.f32.mxu0 0.0
  %181 = vmatmul.mubr.f32.gmra.mrb[0].mxu0 %v57
  %v182 = vpop.f32.mrb[0].mxu0
  %v183 = vadd.f32 0.0, %v182
  %v184 = vpop.f32.mrb[0].mxu0
  %185 = vmatprep.mubr.f32.mxu0 0.0
  %186 = vmatmul.mubr.f32.gmra.mrb[0].mxu0 %v60
  %v187 = vpop.f32.mrb[0].mxu0
  %v188 = vadd.f32 0.0, %v187
  %v189 = vpop.f32.mrb[0].mxu0
  %190 = vmatprep.mubr.f32.mxu0 0.0
  %191 = vmatmul.mubr.f32.gmra.mrb[0].mxu0 %v63
  %v192 = vpop.f32.mrb[0].mxu0
  %v193 = vadd.f32 0.0, %v192
  %v194 = vpop.f32.mrb[0].mxu0
  %195 = vmatprep.mubr.f32.mxu0 0.0
  %196 = vmatmul.mubr.f32.gmra.mrb[0].mxu0 %v66
  %v197 = vpop.f32.mrb[0].mxu0
  %v198 = vadd.f32 0.0, %v197
  %v199 = vpop.f32.mrb[0].mxu0
  %200 = vmatprep.mubr.f32.mxu0 0.0
  %201 = vmatmul.mubr.f32.gmra.mrb[0].mxu0 %v69
  %v202 = vpop.f32.mrb[0].mxu0
  %v203 = vadd.f32 0.0, %v202
  %v204 = vpop.f32.mrb[0].mxu0
  %205 = vmatprep.mubr.f32.mxu0 0.0
  %206 = vmatmul.mubr.f32.gmra.mrb[0].mxu0 %v72
  %v207 = vpop.f32.mrb[0].mxu0
  %v208 = vadd.f32 0.0, %v207
  %v209 = vpop.f32.mrb[0].mxu0
  %210 = vmatprep.mubr.f32.mxu0 0.0
  %211 = vmatmul.mubr.f32.gmra.mrb[0].mxu0 %v75
  %v212 = vpop.f32.mrb[0].mxu0
  %v213 = vadd.f32 0.0, %v212
  %v214 = vpop.f32.mrb[0].mxu0
  %215 = vmatprep.mubr.f32.mxu0 0.0
  %216 = vmatmul.mubr.f32.gmra.mrb[0].mxu0 %v78
  %v217 = vpop.f32.mrb[0].mxu0
  %v218 = vadd.f32 0.0, %v217
  %v219 = vpop.f32.mrb[0].mxu0
  %220 = vmatprep.mubr.f32.mxu0 0.0
  %221 = vmatmul.mubr.f32.gmra.mrb[0].mxu0 %v81
  %v222 = vpop.f32.mrb[0].mxu0
  %v223 = vadd.f32 0.0, %v222
  %v224 = vpop.f32.mrb[0].mxu0
  %225 = vmatprep.mubr.f32.mxu0 0.0
  %226 = vmatmul.mubr.f32.gmra.mrb[0].mxu0 %v84
  %v227 = vpop.f32.mrb[0].mxu0
  %v228 = vadd.f32 0.0, %v227
  %v229 = vpop.f32.mrb[0].mxu0
  %230 = vdwg.mxu0
  %231 = vxpose.xlu0.b32.start [1/16] %v153, 128
  %232 = vxpose.xlu0.b32.cont [2/16] %v158, 128
  %233 = vxpose.xlu0.b32.cont [3/16] 0.0, 128
  %234 = vxpose.xlu0.b32.cont [4/16] 0.0, 128
  %235 = vxpose.xlu0.b32.cont [5/16] 0.0, 128
  %236 = vxpose.xlu0.b32.cont [6/16] 0.0, 128
  %237 = vxpose.xlu0.b32.cont [7/16] 0.0, 128
  %238 = vxpose.xlu0.b32.cont [8/16] 0.0, 128
  %239 = vxpose.xlu0.b32.cont [9/16] 0.0, 128
  %240 = vxpose.xlu0.b32.cont [10/16] 0.0, 128
  %241 = vxpose.xlu0.b32.cont [11/16] 0.0, 128
  %242 = vxpose.xlu0.b32.cont [12/16] 0.0, 128
  %243 = vxpose.xlu0.b32.cont [13/16] 0.0, 128
  %244 = vxpose.xlu0.b32.cont [14/16] 0.0, 128
  %245 = vxpose.xlu0.b32.cont [15/16] 0.0, 128
  %246 = vxpose.xlu0.b32.end [16/16] 0.0, 128
  %v247 = vpop.trf.xlu0
  %v248 = vpop.trf.xlu0
  %v249 = vpop.trf.xlu0
  %v250 = vpop.trf.xlu0
  %v251 = vpop.trf.xlu0
  %v252 = vpop.trf.xlu0
  %v253 = vpop.trf.xlu0
  %v254 = vpop.trf.xlu0
  %v255 = vpop.trf.xlu0
  %v256 = vpop.trf.xlu0
  %v257 = vpop.trf.xlu0
  %v258 = vpop.trf.xlu0
  %v259 = vpop.trf.xlu0
  %v260 = vpop.trf.xlu0
  %v261 = vpop.trf.xlu0
  %v262 = vpop.trf.xlu0
  %263 = vxpose.xlu0.b32.start [1/16] %v163, 128
  %264 = vxpose.xlu0.b32.cont [2/16] %v168, 128
  %265 = vxpose.xlu0.b32.cont [3/16] 0.0, 128
  %266 = vxpose.xlu0.b32.cont [4/16] 0.0, 128
  %267 = vxpose.xlu0.b32.cont [5/16] 0.0, 128
  %268 = vxpose.xlu0.b32.cont [6/16] 0.0, 128
  %269 = vxpose.xlu0.b32.cont [7/16] 0.0, 128
  %270 = vxpose.xlu0.b32.cont [8/16] 0.0, 128
  %271 = vxpose.xlu0.b32.cont [9/16] 0.0, 128
  %272 = vxpose.xlu0.b32.cont [10/16] 0.0, 128
  %273 = vxpose.xlu0.b32.cont [11/16] 0.0, 128
  %274 = vxpose.xlu0.b32.cont [12/16] 0.0, 128
  %275 = vxpose.xlu0.b32.cont [13/16] 0.0, 128
  %276 = vxpose.xlu0.b32.cont [14/16] 0.0, 128
  %277 = vxpose.xlu0.b32.cont [15/16] 0.0, 128
  %278 = vxpose.xlu0.b32.end [16/16] 0.0, 128
  %v279 = vpop.trf.xlu0
  %v280 = vpop.trf.xlu0
  %v281 = vpop.trf.xlu0
  %v282 = vpop.trf.xlu0
  %v283 = vpop.trf.xlu0
  %v284 = vpop.trf.xlu0
  %v285 = vpop.trf.xlu0
  %v286 = vpop.trf.xlu0
  %v287 = vpop.trf.xlu0
  %v288 = vpop.trf.xlu0
  %v289 = vpop.trf.xlu0
  %v290 = vpop.trf.xlu0
  %v291 = vpop.trf.xlu0
  %v292 = vpop.trf.xlu0
  %v293 = vpop.trf.xlu0
  %v294 = vpop.trf.xlu0
  %295 = vxpose.xlu0.b32.start [1/16] %v173, 128
  %296 = vxpose.xlu0.b32.cont [2/16] %v178, 128
  %297 = vxpose.xlu0.b32.cont [3/16] 0.0, 128
  %298 = vxpose.xlu0.b32.cont [4/16] 0.0, 128
  %299 = vxpose.xlu0.b32.cont [5/16] 0.0, 128
  %300 = vxpose.xlu0.b32.cont [6/16] 0.0, 128
  %301 = vxpose.xlu0.b32.cont [7/16] 0.0, 128
  %302 = vxpose.xlu0.b32.cont [8/16] 0.0, 128
  %303 = vxpose.xlu0.b32.cont [9/16] 0.0, 128
  %304 = vxpose.xlu0.b32.cont [10/16] 0.0, 128
  %305 = vxpose.xlu0.b32.cont [11/16] 0.0, 128
  %306 = vxpose.xlu0.b32.cont [12/16] 0.0, 128
  %307 = vxpose.xlu0.b32.cont [13/16] 0.0, 128
  %308 = vxpose.xlu0.b32.cont [14/16] 0.0, 128
  %309 = vxpose.xlu0.b32.cont [15/16] 0.0, 128
  %310 = vxpose.xlu0.b32.end [16/16] 0.0, 128
  %v311 = vpop.trf.xlu0
  %v312 = vpop.trf.xlu0
  %v313 = vpop.trf.xlu0
  %v314 = vpop.trf.xlu0
  %v315 = vpop.trf.xlu0
  %v316 = vpop.trf.xlu0
  %v317 = vpop.trf.xlu0
  %v318 = vpop.trf.xlu0
  %v319 = vpop.trf.xlu0
  %v320 = vpop.trf.xlu0
  %v321 = vpop.trf.xlu0
  %v322 = vpop.trf.xlu0
  %v323 = vpop.trf.xlu0
  %v324 = vpop.trf.xlu0
  %v325 = vpop.trf.xlu0
  %v326 = vpop.trf.xlu0
  %327 = vxpose.xlu0.b32.start [1/16] %v183, 128
  %328 = vxpose.xlu0.b32.cont [2/16] %v188, 128
  %329 = vxpose.xlu0.b32.cont [3/16] 0.0, 128
  %330 = vxpose.xlu0.b32.cont [4/16] 0.0, 128
  %331 = vxpose.xlu0.b32.cont [5/16] 0.0, 128
  %332 = vxpose.xlu0.b32.cont [6/16] 0.0, 128
  %333 = vxpose.xlu0.b32.cont [7/16] 0.0, 128
  %334 = vxpose.xlu0.b32.cont [8/16] 0.0, 128
  %335 = vxpose.xlu0.b32.cont [9/16] 0.0, 128
  %336 = vxpose.xlu0.b32.cont [10/16] 0.0, 128
  %337 = vxpose.xlu0.b32.cont [11/16] 0.0, 128
  %338 = vxpose.xlu0.b32.cont [12/16] 0.0, 128
  %339 = vxpose.xlu0.b32.cont [13/16] 0.0, 128
  %340 = vxpose.xlu0.b32.cont [14/16] 0.0, 128
  %341 = vxpose.xlu0.b32.cont [15/16] 0.0, 128
  %342 = vxpose.xlu0.b32.end [16/16] 0.0, 128
  %v343 = vpop.trf.xlu0
  %v344 = vpop.trf.xlu0
  %v345 = vpop.trf.xlu0
  %v346 = vpop.trf.xlu0
  %v347 = vpop.trf.xlu0
  %v348 = vpop.trf.xlu0
  %v349 = vpop.trf.xlu0
  %v350 = vpop.trf.xlu0
  %v351 = vpop.trf.xlu0
  %v352 = vpop.trf.xlu0
  %v353 = vpop.trf.xlu0
  %v354 = vpop.trf.xlu0
  %v355 = vpop.trf.xlu0
  %v356 = vpop.trf.xlu0
  %v357 = vpop.trf.xlu0
  %v358 = vpop.trf.xlu0
  %359 = vxpose.xlu0.b32.start [1/16] %v193, 128
  %360 = vxpose.xlu0.b32.cont [2/16] %v198, 128
  %361 = vxpose.xlu0.b32.cont [3/16] 0.0, 128
  %362 = vxpose.xlu0.b32.cont [4/16] 0.0, 128
  %363 = vxpose.xlu0.b32.cont [5/16] 0.0, 128
  %364 = vxpose.xlu0.b32.cont [6/16] 0.0, 128
  %365 = vxpose.xlu0.b32.cont [7/16] 0.0, 128
  %366 = vxpose.xlu0.b32.cont [8/16] 0.0, 128
  %367 = vxpose.xlu0.b32.cont [9/16] 0.0, 128
  %368 = vxpose.xlu0.b32.cont [10/16] 0.0, 128
  %369 = vxpose.xlu0.b32.cont [11/16] 0.0, 128
  %370 = vxpose.xlu0.b32.cont [12/16] 0.0, 128
  %371 = vxpose.xlu0.b32.cont [13/16] 0.0, 128
  %372 = vxpose.xlu0.b32.cont [14/16] 0.0, 128
  %373 = vxpose.xlu0.b32.cont [15/16] 0.0, 128
  %374 = vxpose.xlu0.b32.end [16/16] 0.0, 128
  %v375 = vpop.trf.xlu0
  %v376 = vpop.trf.xlu0
  %v377 = vpop.trf.xlu0
  %v378 = vpop.trf.xlu0
  %v379 = vpop.trf.xlu0
  %v380 = vpop.trf.xlu0
  %v381 = vpop.trf.xlu0
  %v382 = vpop.trf.xlu0
  %v383 = vpop.trf.xlu0
  %v384 = vpop.trf.xlu0
  %v385 = vpop.trf.xlu0
  %v386 = vpop.trf.xlu0
  %v387 = vpop.trf.xlu0
  %v388 = vpop.trf.xlu0
  %v389 = vpop.trf.xlu0
  %v390 = vpop.trf.xlu0
  %391 = vxpose.xlu0.b32.start [1/16] %v203, 128
  %392 = vxpose.xlu0.b32.cont [2/16] %v208, 128
  %393 = vxpose.xlu0.b32.cont [3/16] 0.0, 128
  %394 = vxpose.xlu0.b32.cont [4/16] 0.0, 128
  %395 = vxpose.xlu0.b32.cont [5/16] 0.0, 128
  %396 = vxpose.xlu0.b32.cont [6/16] 0.0, 128
  %397 = vxpose.xlu0.b32.cont [7/16] 0.0, 128
  %398 = vxpose.xlu0.b32.cont [8/16] 0.0, 128
  %399 = vxpose.xlu0.b32.cont [9/16] 0.0, 128
  %400 = vxpose.xlu0.b32.cont [10/16] 0.0, 128
  %401 = vxpose.xlu0.b32.cont [11/16] 0.0, 128
  %402 = vxpose.xlu0.b32.cont [12/16] 0.0, 128
  %403 = vxpose.xlu0.b32.cont [13/16] 0.0, 128
  %404 = vxpose.xlu0.b32.cont [14/16] 0.0, 128
  %405 = vxpose.xlu0.b32.cont [15/16] 0.0, 128
  %406 = vxpose.xlu0.b32.end [16/16] 0.0, 128
  %v407 = vpop.trf.xlu0
  %v408 = vpop.trf.xlu0
  %v409 = vpop.trf.xlu0
  %v410 = vpop.trf.xlu0
  %v411 = vpop.trf.xlu0
  %v412 = vpop.trf.xlu0
  %v413 = vpop.trf.xlu0
  %v414 = vpop.trf.xlu0
  %v415 = vpop.trf.xlu0
  %v416 = vpop.trf.xlu0
  %v417 = vpop.trf.xlu0
  %v418 = vpop.trf.xlu0
  %v419 = vpop.trf.xlu0
  %v420 = vpop.trf.xlu0
  %v421 = vpop.trf.xlu0
  %v422 = vpop.trf.xlu0
  %423 = vxpose.xlu0.b32.start [1/16] %v213, 128
  %424 = vxpose.xlu0.b32.cont [2/16] %v218, 128
  %425 = vxpose.xlu0.b32.cont [3/16] 0.0, 128
  %426 = vxpose.xlu0.b32.cont [4/16] 0.0, 128
  %427 = vxpose.xlu0.b32.cont [5/16] 0.0, 128
  %428 = vxpose.xlu0.b32.cont [6/16] 0.0, 128
  %429 = vxpose.xlu0.b32.cont [7/16] 0.0, 128
  %430 = vxpose.xlu0.b32.cont [8/16] 0.0, 128
  %431 = vxpose.xlu0.b32.cont [9/16] 0.0, 128
  %432 = vxpose.xlu0.b32.cont [10/16] 0.0, 128
  %433 = vxpose.xlu0.b32.cont [11/16] 0.0, 128
  %434 = vxpose.xlu0.b32.cont [12/16] 0.0, 128
  %435 = vxpose.xlu0.b32.cont [13/16] 0.0, 128
  %436 = vxpose.xlu0.b32.cont [14/16] 0.0, 128
  %437 = vxpose.xlu0.b32.cont [15/16] 0.0, 128
  %438 = vxpose.xlu0.b32.end [16/16] 0.0, 128
  %v439 = vpop.trf.xlu0
  %v440 = vpop.trf.xlu0
  %v441 = vpop.trf.xlu0
  %v442 = vpop.trf.xlu0
  %v443 = vpop.trf.xlu0
  %v444 = vpop.trf.xlu0
  %v445 = vpop.trf.xlu0
  %v446 = vpop.trf.xlu0
  %v447 = vpop.trf.xlu0
  %v448 = vpop.trf.xlu0
  %v449 = vpop.trf.xlu0
  %v450 = vpop.trf.xlu0
  %v451 = vpop.trf.xlu0
  %v452 = vpop.trf.xlu0
  %v453 = vpop.trf.xlu0
  %v454 = vpop.trf.xlu0
  %455 = vxpose.xlu0.b32.start [1/16] %v223, 128
  %456 = vxpose.xlu0.b32.cont [2/16] %v228, 128
  %457 = vxpose.xlu0.b32.cont [3/16] 0.0, 128
  %458 = vxpose.xlu0.b32.cont [4/16] 0.0, 128
  %459 = vxpose.xlu0.b32.cont [5/16] 0.0, 128
  %460 = vxpose.xlu0.b32.cont [6/16] 0.0, 128
  %461 = vxpose.xlu0.b32.cont [7/16] 0.0, 128
  %462 = vxpose.xlu0.b32.cont [8/16] 0.0, 128
  %463 = vxpose.xlu0.b32.cont [9/16] 0.0, 128
  %464 = vxpose.xlu0.b32.cont [10/16] 0.0, 128
  %465 = vxpose.xlu0.b32.cont [11/16] 0.0, 128
  %466 = vxpose.xlu0.b32.cont [12/16] 0.0, 128
  %467 = vxpose.xlu0.b32.cont [13/16] 0.0, 128
  %468 = vxpose.xlu0.b32.cont [14/16] 0.0, 128
  %469 = vxpose.xlu0.b32.cont [15/16] 0.0, 128
  %470 = vxpose.xlu0.b32.end [16/16] 0.0, 128
  %v471 = vpop.trf.xlu0
  %v472 = vpop.trf.xlu0
  %v473 = vpop.trf.xlu0
  %v474 = vpop.trf.xlu0
  %v475 = vpop.trf.xlu0
  %v476 = vpop.trf.xlu0
  %v477 = vpop.trf.xlu0
  %v478 = vpop.trf.xlu0
  %v479 = vpop.trf.xlu0
  %v480 = vpop.trf.xlu0
  %v481 = vpop.trf.xlu0
  %v482 = vpop.trf.xlu0
  %v483 = vpop.trf.xlu0
  %v484 = vpop.trf.xlu0
  %v485 = vpop.trf.xlu0
  %v486 = vpop.trf.xlu0
  %503 = vrot.lane.b32.xlu0 %v153, 112
  %v504 = vpop.permute.xlu0 %503
  %505 = vrot.lane.b32.xlu0 %v158, 112
  %v506 = vpop.permute.xlu0 %505
  %507 = vrot.lane.b32.xlu0 %v163, 112
  %v508 = vpop.permute.xlu0 %507
  %509 = vrot.lane.b32.xlu0 %v168, 112
  %v510 = vpop.permute.xlu0 %509
  %511 = vrot.lane.b32.xlu0 %v173, 112
  %v512 = vpop.permute.xlu0 %511
  %513 = vrot.lane.b32.xlu0 %v178, 112
  %v514 = vpop.permute.xlu0 %513
  %515 = vrot.lane.b32.xlu0 %v183, 112
  %v516 = vpop.permute.xlu0 %515
  %517 = vrot.lane.b32.xlu0 %v188, 112
  %v518 = vpop.permute.xlu0 %517
  %519 = vrot.lane.b32.xlu0 %v193, 112
  %v520 = vpop.permute.xlu0 %519
  %521 = vrot.lane.b32.xlu0 %v198, 112
  %v522 = vpop.permute.xlu0 %521
  %523 = vrot.lane.b32.xlu0 %v203, 112
  %v524 = vpop.permute.xlu0 %523
  %525 = vrot.lane.b32.xlu0 %v208, 112
  %v526 = vpop.permute.xlu0 %525
  %527 = vrot.lane.b32.xlu0 %v213, 112
  %v528 = vpop.permute.xlu0 %527
  %529 = vrot.lane.b32.xlu0 %v218, 112
  %v530 = vpop.permute.xlu0 %529
  %531 = vrot.lane.b32.xlu0 %v223, 112
  %v532 = vpop.permute.xlu0 %531
  %533 = vrot.lane.b32.xlu0 %v228, 112
  %v534 = vpop.permute.xlu0 %533
  %551 = vxpose.xlu0.b32.start [1/16] %v504, 128
  %552 = vxpose.xlu0.b32.cont [2/16] %v506, 128
  %553 = vxpose.xlu0.b32.cont [3/16] 0.0, 128
  %554 = vxpose.xlu0.b32.cont [4/16] 0.0, 128
  %555 = vxpose.xlu0.b32.cont [5/16] 0.0, 128
  %556 = vxpose.xlu0.b32.cont [6/16] 0.0, 128
  %557 = vxpose.xlu0.b32.cont [7/16] 0.0, 128
  %558 = vxpose.xlu0.b32.cont [8/16] 0.0, 128
  %559 = vxpose.xlu0.b32.cont [9/16] 0.0, 128
  %560 = vxpose.xlu0.b32.cont [10/16] 0.0, 128
  %561 = vxpose.xlu0.b32.cont [11/16] 0.0, 128
  %562 = vxpose.xlu0.b32.cont [12/16] 0.0, 128
  %563 = vxpose.xlu0.b32.cont [13/16] 0.0, 128
  %564 = vxpose.xlu0.b32.cont [14/16] 0.0, 128
  %565 = vxpose.xlu0.b32.cont [15/16] 0.0, 128
  %566 = vxpose.xlu0.b32.end [16/16] 0.0, 128
  %v567 = vpop.trf.xlu0
  %v568 = vpop.trf.xlu0
  %v569 = vpop.trf.xlu0
  %v570 = vpop.trf.xlu0
  %v571 = vpop.trf.xlu0
  %v572 = vpop.trf.xlu0
  %v573 = vpop.trf.xlu0
  %v574 = vpop.trf.xlu0
  %v575 = vpop.trf.xlu0
  %v576 = vpop.trf.xlu0
  %v577 = vpop.trf.xlu0
  %v578 = vpop.trf.xlu0
  %v579 = vpop.trf.xlu0
  %v580 = vpop.trf.xlu0
  %v581 = vpop.trf.xlu0
  %v582 = vpop.trf.xlu0
  %583 = vxpose.xlu0.b32.start [1/16] %v508, 128
  %584 = vxpose.xlu0.b32.cont [2/16] %v510, 128
  %585 = vxpose.xlu0.b32.cont [3/16] 0.0, 128
  %586 = vxpose.xlu0.b32.cont [4/16] 0.0, 128
  %587 = vxpose.xlu0.b32.cont [5/16] 0.0, 128
  %588 = vxpose.xlu0.b32.cont [6/16] 0.0, 128
  %589 = vxpose.xlu0.b32.cont [7/16] 0.0, 128
  %590 = vxpose.xlu0.b32.cont [8/16] 0.0, 128
  %591 = vxpose.xlu0.b32.cont [9/16] 0.0, 128
  %592 = vxpose.xlu0.b32.cont [10/16] 0.0, 128
  %593 = vxpose.xlu0.b32.cont [11/16] 0.0, 128
  %594 = vxpose.xlu0.b32.cont [12/16] 0.0, 128
  %595 = vxpose.xlu0.b32.cont [13/16] 0.0, 128
  %596 = vxpose.xlu0.b32.cont [14/16] 0.0, 128
  %597 = vxpose.xlu0.b32.cont [15/16] 0.0, 128
  %598 = vxpose.xlu0.b32.end [16/16] 0.0, 128
  %v599 = vpop.trf.xlu0
  %v600 = vpop.trf.xlu0
  %v601 = vpop.trf.xlu0
  %v602 = vpop.trf.xlu0
  %v603 = vpop.trf.xlu0
  %v604 = vpop.trf.xlu0
  %v605 = vpop.trf.xlu0
  %v606 = vpop.trf.xlu0
  %v607 = vpop.trf.xlu0
  %v608 = vpop.trf.xlu0
  %v609 = vpop.trf.xlu0
  %v610 = vpop.trf.xlu0
  %v611 = vpop.trf.xlu0
  %v612 = vpop.trf.xlu0
  %v613 = vpop.trf.xlu0
  %v614 = vpop.trf.xlu0
  %615 = vxpose.xlu0.b32.start [1/16] %v512, 128
  %616 = vxpose.xlu0.b32.cont [2/16] %v514, 128
  %617 = vxpose.xlu0.b32.cont [3/16] 0.0, 128
  %618 = vxpose.xlu0.b32.cont [4/16] 0.0, 128
  %619 = vxpose.xlu0.b32.cont [5/16] 0.0, 128
  %620 = vxpose.xlu0.b32.cont [6/16] 0.0, 128
  %621 = vxpose.xlu0.b32.cont [7/16] 0.0, 128
  %622 = vxpose.xlu0.b32.cont [8/16] 0.0, 128
  %623 = vxpose.xlu0.b32.cont [9/16] 0.0, 128
  %624 = vxpose.xlu0.b32.cont [10/16] 0.0, 128
  %625 = vxpose.xlu0.b32.cont [11/16] 0.0, 128
  %626 = vxpose.xlu0.b32.cont [12/16] 0.0, 128
  %627 = vxpose.xlu0.b32.cont [13/16] 0.0, 128
  %628 = vxpose.xlu0.b32.cont [14/16] 0.0, 128
  %629 = vxpose.xlu0.b32.cont [15/16] 0.0, 128
  %630 = vxpose.xlu0.b32.end [16/16] 0.0, 128
  %v631 = vpop.trf.xlu0
  %v632 = vpop.trf.xlu0
  %v633 = vpop.trf.xlu0
  %v634 = vpop.trf.xlu0
  %v635 = vpop.trf.xlu0
  %v636 = vpop.trf.xlu0
  %v637 = vpop.trf.xlu0
  %v638 = vpop.trf.xlu0
  %v639 = vpop.trf.xlu0
  %v640 = vpop.trf.xlu0
  %v641 = vpop.trf.xlu0
  %v642 = vpop.trf.xlu0
  %v643 = vpop.trf.xlu0
  %v644 = vpop.trf.xlu0
  %v645 = vpop.trf.xlu0
  %v646 = vpop.trf.xlu0
  %647 = vxpose.xlu0.b32.start [1/16] %v516, 128
  %648 = vxpose.xlu0.b32.cont [2/16] %v518, 128
  %649 = vxpose.xlu0.b32.cont [3/16] 0.0, 128
  %650 = vxpose.xlu0.b32.cont [4/16] 0.0, 128
  %651 = vxpose.xlu0.b32.cont [5/16] 0.0, 128
  %652 = vxpose.xlu0.b32.cont [6/16] 0.0, 128
  %653 = vxpose.xlu0.b32.cont [7/16] 0.0, 128
  %654 = vxpose.xlu0.b32.cont [8/16] 0.0, 128
  %655 = vxpose.xlu0.b32.cont [9/16] 0.0, 128
  %656 = vxpose.xlu0.b32.cont [10/16] 0.0, 128
  %657 = vxpose.xlu0.b32.cont [11/16] 0.0, 128
  %658 = vxpose.xlu0.b32.cont [12/16] 0.0, 128
  %659 = vxpose.xlu0.b32.cont [13/16] 0.0, 128
  %660 = vxpose.xlu0.b32.cont [14/16] 0.0, 128
  %661 = vxpose.xlu0.b32.cont [15/16] 0.0, 128
  %662 = vxpose.xlu0.b32.end [16/16] 0.0, 128
  %v663 = vpop.trf.xlu0
  %v664 = vpop.trf.xlu0
  %v665 = vpop.trf.xlu0
  %v666 = vpop.trf.xlu0
  %v667 = vpop.trf.xlu0
  %v668 = vpop.trf.xlu0
  %v669 = vpop.trf.xlu0
  %v670 = vpop.trf.xlu0
  %v671 = vpop.trf.xlu0
  %v672 = vpop.trf.xlu0
  %v673 = vpop.trf.xlu0
  %v674 = vpop.trf.xlu0
  %v675 = vpop.trf.xlu0
  %v676 = vpop.trf.xlu0
  %v677 = vpop.trf.xlu0
  %v678 = vpop.trf.xlu0
  %679 = vxpose.xlu0.b32.start [1/16] %v520, 128
  %680 = vxpose.xlu0.b32.cont [2/16] %v522, 128
  %681 = vxpose.xlu0.b32.cont [3/16] 0.0, 128
  %682 = vxpose.xlu0.b32.cont [4/16] 0.0, 128
  %683 = vxpose.xlu0.b32.cont [5/16] 0.0, 128
  %684 = vxpose.xlu0.b32.cont [6/16] 0.0, 128
  %685 = vxpose.xlu0.b32.cont [7/16] 0.0, 128
  %686 = vxpose.xlu0.b32.cont [8/16] 0.0, 128
  %687 = vxpose.xlu0.b32.cont [9/16] 0.0, 128
  %688 = vxpose.xlu0.b32.cont [10/16] 0.0, 128
  %689 = vxpose.xlu0.b32.cont [11/16] 0.0, 128
  %690 = vxpose.xlu0.b32.cont [12/16] 0.0, 128
  %691 = vxpose.xlu0.b32.cont [13/16] 0.0, 128
  %692 = vxpose.xlu0.b32.cont [14/16] 0.0, 128
  %693 = vxpose.xlu0.b32.cont [15/16] 0.0, 128
  %694 = vxpose.xlu0.b32.end [16/16] 0.0, 128
  %v695 = vpop.trf.xlu0
  %v696 = vpop.trf.xlu0
  %v697 = vpop.trf.xlu0
  %v698 = vpop.trf.xlu0
  %v699 = vpop.trf.xlu0
  %v700 = vpop.trf.xlu0
  %v701 = vpop.trf.xlu0
  %v702 = vpop.trf.xlu0
  %v703 = vpop.trf.xlu0
  %v704 = vpop.trf.xlu0
  %v705 = vpop.trf.xlu0
  %v706 = vpop.trf.xlu0
  %v707 = vpop.trf.xlu0
  %v708 = vpop.trf.xlu0
  %v709 = vpop.trf.xlu0
  %v710 = vpop.trf.xlu0
  %711 = vxpose.xlu0.b32.start [1/16] %v524, 128
  %712 = vxpose.xlu0.b32.cont [2/16] %v526, 128
  %713 = vxpose.xlu0.b32.cont [3/16] 0.0, 128
  %714 = vxpose.xlu0.b32.cont [4/16] 0.0, 128
  %715 = vxpose.xlu0.b32.cont [5/16] 0.0, 128
  %716 = vxpose.xlu0.b32.cont [6/16] 0.0, 128
  %717 = vxpose.xlu0.b32.cont [7/16] 0.0, 128
  %718 = vxpose.xlu0.b32.cont [8/16] 0.0, 128
  %719 = vxpose.xlu0.b32.cont [9/16] 0.0, 128
  %720 = vxpose.xlu0.b32.cont [10/16] 0.0, 128
  %721 = vxpose.xlu0.b32.cont [11/16] 0.0, 128
  %722 = vxpose.xlu0.b32.cont [12/16] 0.0, 128
  %723 = vxpose.xlu0.b32.cont [13/16] 0.0, 128
  %724 = vxpose.xlu0.b32.cont [14/16] 0.0, 128
  %725 = vxpose.xlu0.b32.cont [15/16] 0.0, 128
  %726 = vxpose.xlu0.b32.end [16/16] 0.0, 128
  %v727 = vpop.trf.xlu0
  %v728 = vpop.trf.xlu0
  %v729 = vpop.trf.xlu0
  %v730 = vpop.trf.xlu0
  %v731 = vpop.trf.xlu0
  %v732 = vpop.trf.xlu0
  %v733 = vpop.trf.xlu0
  %v734 = vpop.trf.xlu0
  %v735 = vpop.trf.xlu0
  %v736 = vpop.trf.xlu0
  %v737 = vpop.trf.xlu0
  %v738 = vpop.trf.xlu0
  %v739 = vpop.trf.xlu0
  %v740 = vpop.trf.xlu0
  %v741 = vpop.trf.xlu0
  %v742 = vpop.trf.xlu0
  %743 = vxpose.xlu0.b32.start [1/16] %v528, 128
  %744 = vxpose.xlu0.b32.cont [2/16] %v530, 128
  %745 = vxpose.xlu0.b32.cont [3/16] 0.0, 128
  %746 = vxpose.xlu0.b32.cont [4/16] 0.0, 128
  %747 = vxpose.xlu0.b32.cont [5/16] 0.0, 128
  %748 = vxpose.xlu0.b32.cont [6/16] 0.0, 128
  %749 = vxpose.xlu0.b32.cont [7/16] 0.0, 128
  %750 = vxpose.xlu0.b32.cont [8/16] 0.0, 128
  %751 = vxpose.xlu0.b32.cont [9/16] 0.0, 128
  %752 = vxpose.xlu0.b32.cont [10/16] 0.0, 128
  %753 = vxpose.xlu0.b32.cont [11/16] 0.0, 128
  %754 = vxpose.xlu0.b32.cont [12/16] 0.0, 128
  %755 = vxpose.xlu0.b32.cont [13/16] 0.0, 128
  %756 = vxpose.xlu0.b32.cont [14/16] 0.0, 128
  %757 = vxpose.xlu0.b32.cont [15/16] 0.0, 128
  %758 = vxpose.xlu0.b32.end [16/16] 0.0, 128
  %v759 = vpop.trf.xlu0
  %v760 = vpop.trf.xlu0
  %v761 = vpop.trf.xlu0
  %v762 = vpop.trf.xlu0
  %v763 = vpop.trf.xlu0
  %v764 = vpop.trf.xlu0
  %v765 = vpop.trf.xlu0
  %v766 = vpop.trf.xlu0
  %v767 = vpop.trf.xlu0
  %v768 = vpop.trf.xlu0
  %v769 = vpop.trf.xlu0
  %v770 = vpop.trf.xlu0
  %v771 = vpop.trf.xlu0
  %v772 = vpop.trf.xlu0
  %v773 = vpop.trf.xlu0
  %v774 = vpop.trf.xlu0
  %775 = vxpose.xlu0.b32.start [1/16] %v532, 128
  %776 = vxpose.xlu0.b32.cont [2/16] %v534, 128
  %777 = vxpose.xlu0.b32.cont [3/16] 0.0, 128
  %778 = vxpose.xlu0.b32.cont [4/16] 0.0, 128
  %779 = vxpose.xlu0.b32.cont [5/16] 0.0, 128
  %780 = vxpose.xlu0.b32.cont [6/16] 0.0, 128
  %781 = vxpose.xlu0.b32.cont [7/16] 0.0, 128
  %782 = vxpose.xlu0.b32.cont [8/16] 0.0, 128
  %783 = vxpose.xlu0.b32.cont [9/16] 0.0, 128
  %784 = vxpose.xlu0.b32.cont [10/16] 0.0, 128
  %785 = vxpose.xlu0.b32.cont [11/16] 0.0, 128
  %786 = vxpose.xlu0.b32.cont [12/16] 0.0, 128
  %787 = vxpose.xlu0.b32.cont [13/16] 0.0, 128
  %788 = vxpose.xlu0.b32.cont [14/16] 0.0, 128
  %789 = vxpose.xlu0.b32.cont [15/16] 0.0, 128
  %790 = vxpose.xlu0.b32.end [16/16] 0.0, 128
  %v791 = vpop.trf.xlu0
  %v792 = vpop.trf.xlu0
  %v793 = vpop.trf.xlu0
  %v794 = vpop.trf.xlu0
  %v795 = vpop.trf.xlu0
  %v796 = vpop.trf.xlu0
  %v797 = vpop.trf.xlu0
  %v798 = vpop.trf.xlu0
  %v799 = vpop.trf.xlu0
  %v800 = vpop.trf.xlu0
  %v801 = vpop.trf.xlu0
  %v802 = vpop.trf.xlu0
  %v803 = vpop.trf.xlu0
  %v804 = vpop.trf.xlu0
  %v805 = vpop.trf.xlu0
  %v806 = vpop.trf.xlu0
  %823 = vrot.lane.b32.xlu0 %v567, 16
  %v824 = vpop.permute.xlu0 %823
  %825 = vrot.lane.b32.xlu0 %v568, 16
  %v826 = vpop.permute.xlu0 %825
  %827 = vrot.lane.b32.xlu0 %v599, 16
  %v828 = vpop.permute.xlu0 %827
  %829 = vrot.lane.b32.xlu0 %v600, 16
  %v830 = vpop.permute.xlu0 %829
  %831 = vrot.lane.b32.xlu0 %v631, 16
  %v832 = vpop.permute.xlu0 %831
  %833 = vrot.lane.b32.xlu0 %v632, 16
  %v834 = vpop.permute.xlu0 %833
  %835 = vrot.lane.b32.xlu0 %v663, 16
  %v836 = vpop.permute.xlu0 %835
  %837 = vrot.lane.b32.xlu0 %v664, 16
  %v838 = vpop.permute.xlu0 %837
  %839 = vrot.lane.b32.xlu0 %v695, 16
  %v840 = vpop.permute.xlu0 %839
  %841 = vrot.lane.b32.xlu0 %v696, 16
  %v842 = vpop.permute.xlu0 %841
  %843 = vrot.lane.b32.xlu0 %v727, 16
  %v844 = vpop.permute.xlu0 %843
  %845 = vrot.lane.b32.xlu0 %v728, 16
  %v846 = vpop.permute.xlu0 %845
  %847 = vrot.lane.b32.xlu0 %v759, 16
  %v848 = vpop.permute.xlu0 %847
  %849 = vrot.lane.b32.xlu0 %v760, 16
  %v850 = vpop.permute.xlu0 %849
  %851 = vrot.lane.b32.xlu0 %v791, 16
  %v852 = vpop.permute.xlu0 %851
  %853 = vrot.lane.b32.xlu0 %v792, 16
  %v854 = vpop.permute.xlu0 %853
  %vm871 = vcmask 130048
  %v872 = vsel %vm871, %v247, %v824
  %v873 = vsel %vm871, %v248, %v826
  %v874 = vsel %vm871, %v279, %v828
  %v875 = vsel %vm871, %v280, %v830
  %v876 = vsel %vm871, %v311, %v832
  %v877 = vsel %vm871, %v312, %v834
  %v878 = vsel %vm871, %v343, %v836
  %v879 = vsel %vm871, %v344, %v838
  %v880 = vsel %vm871, %v375, %v840
  %v881 = vsel %vm871, %v376, %v842
  %v882 = vsel %vm871, %v407, %v844
  %v883 = vsel %vm871, %v408, %v846
  %v884 = vsel %vm871, %v439, %v848
  %v885 = vsel %vm871, %v440, %v850
  %v886 = vsel %vm871, %v471, %v852
  %v887 = vsel %vm871, %v472, %v854
  %v888 = vld [vmem:[%s2] sm:$0xff]
  %v889 = vld [vmem:[%s2 + $0x8] sm:$0xff]
  %v890 = vld [vmem:[%s2 + $0x10] sm:$0xff]
  %v891 = vld [vmem:[%s2 + $0x18] sm:$0xff]
  %v893 = vsel %vm37, %v872, 0
  %v896 = vsel %vm37, %v873, 0
  %v899 = vsel %vm37, %v874, 0
  %v902 = vsel %vm37, %v875, 0
  %v905 = vsel %vm37, %v876, 0
  %v908 = vsel %vm37, %v877, 0
  %v911 = vsel %vm37, %v878, 0
  %v914 = vsel %vm37, %v879, 0
  %v917 = vsel %vm37, %v880, 0
  %v920 = vsel %vm37, %v881, 0
  %v923 = vsel %vm37, %v882, 0
  %v926 = vsel %vm37, %v883, 0
  %v929 = vsel %vm37, %v884, 0
  %v932 = vsel %vm37, %v885, 0
  %v935 = vsel %vm37, %v886, 0
  %v938 = vsel %vm37, %v887, 0
  %940 = vmatprep.subr.mxu0 0.0
  %941 = vmatpush1.msra.mxu0 %v888
  %942 = vmatprep.subr.mxu0 0.0
  %943 = vmatpush1.msra.mxu0 %v889
  %944 = vmatprep.subr.mxu0 0.0
  %945 = vmatpush1.msra.mxu0 %v890
  %946 = vmatprep.subr.mxu0 0.0
  %947 = vmatpush1.msra.mxu0 %v891
  %948 = vmatprep.subr.mxu0 0.0
  %949 = vmatpush1.msra.mxu0 0.0
  %950 = vmatprep.subr.mxu0 0.0
  %951 = vmatpush1.msra.mxu0 0.0
  %952 = vmatprep.subr.mxu0 0.0
  %953 = vmatpush1.msra.mxu0 0.0
  %954 = vmatprep.subr.mxu0 0.0
  %955 = vmatpush1.msra.mxu0 0.0
  %956 = vmatprep.subr.mxu0 0.0
  %957 = vmatpush1.msra.mxu0 0.0
  %958 = vmatprep.subr.mxu0 0.0
  %959 = vmatpush1.msra.mxu0 0.0
  %960 = vmatprep.subr.mxu0 0.0
  %961 = vmatpush1.msra.mxu0 0.0
  %962 = vmatprep.subr.mxu0 0.0
  %963 = vmatpush1.msra.mxu0 0.0
  %964 = vmatprep.subr.mxu0 0.0
  %965 = vmatpush1.msra.mxu0 0.0
  %966 = vmatprep.subr.mxu0 0.0
  %967 = vmatpush1.msra.mxu0 0.0
  %968 = vmatprep.subr.mxu0 0.0
  %969 = vmatpush1.msra.mxu0 0.0
  %970 = vmatprep.subr.mxu0 0.0
  %971 = vmatpush1.msra.mxu0 0.0
  %972 = vmatprep.subr.mxu0 0.0
  %973 = vmatpush1.msra.mxu0 0.0
  %974 = vmatprep.subr.mxu0 0.0
  %975 = vmatpush1.msra.mxu0 0.0
  %976 = vmatprep.subr.mxu0 0.0
  %977 = vmatpush1.msra.mxu0 0.0
  %978 = vmatprep.subr.mxu0 0.0
  %979 = vmatpush1.msra.mxu0 0.0
  %980 = vmatprep.subr.mxu0 0.0
  %981 = vmatpush1.msra.mxu0 0.0
  %982 = vmatprep.subr.mxu0 0.0
  %983 = vmatpush1.msra.mxu0 0.0
  %984 = vmatprep.subr.mxu0 0.0
  %985 = vmatpush1.msra.mxu0 0.0
  %986 = vmatprep.subr.mxu0 0.0
  %987 = vmatpush1.msra.mxu0 0.0
  %988 = vmatprep.subr.mxu0 0.0
  %989 = vmatpush1.msra.mxu0 0.0
  %990 = vmatprep.subr.mxu0 0.0
  %991 = vmatpush1.msra.mxu0 0.0
  %992 = vmatprep.subr.mxu0 0.0
  %993 = vmatpush1.msra.mxu0 0.0
  %994 = vmatprep.subr.mxu0 0.0
  %995 = vmatpush1.msra.mxu0 0.0
  %996 = vmatprep.subr.mxu0 0.0
  %997 = vmatpush1.msra.mxu0 0.0
  %998 = vmatprep.subr.mxu0 0.0
  %999 = vmatpush1.msra.mxu0 0.0
  %1000 = vmatprep.subr.mxu0 0.0
  %1001 = vmatpush1.msra.mxu0 0.0
  %1002 = vmatprep.subr.mxu0 0.0
  %1003 = vmatpush1.msra.mxu0 0.0
  %1004 = vmatprep.mubr.f32.mxu0 0.0
  %1005 = vmatmul.mubr.f32.gmra.mrb[0].mxu0 %v893
  %v1006 = vpop.f32.mrb[0].mxu0
  %v1007 = vadd.f32 0.0, %v1006
  %v1008 = vpop.f32.mrb[0].mxu0
  %1009 = vmatprep.mubr.f32.mxu0 0.0
  %1010 = vmatmul.mubr.f32.gmra.mrb[0].mxu0 %v896
  %v1011 = vpop.f32.mrb[0].mxu0
  %v1012 = vadd.f32 0.0, %v1011
  %v1013 = vpop.f32.mrb[0].mxu0
  %1014 = vmatprep.mubr.f32.mxu0 0.0
  %1015 = vmatmul.mubr.f32.gmra.mrb[0].mxu0 %v899
  %v1016 = vpop.f32.mrb[0].mxu0
  %v1017 = vadd.f32 0.0, %v1016
  %v1018 = vpop.f32.mrb[0].mxu0
  %1019 = vmatprep.mubr.f32.mxu0 0.0
  %1020 = vmatmul.mubr.f32.gmra.mrb[0].mxu0 %v902
  %v1021 = vpop.f32.mrb[0].mxu0
  %v1022 = vadd.f32 0.0, %v1021
  %v1023 = vpop.f32.mrb[0].mxu0
  %1024 = vmatprep.mubr.f32.mxu0 0.0
  %1025 = vmatmul.mubr.f32.gmra.mrb[0].mxu0 %v905
  %v1026 = vpop.f32.mrb[0].mxu0
  %v1027 = vadd.f32 0.0, %v1026
  %v1028 = vpop.f32.mrb[0].mxu0
  %1029 = vmatprep.mubr.f32.mxu0 0.0
  %1030 = vmatmul.mubr.f32.gmra.mrb[0].mxu0 %v908
  %v1031 = vpop.f32.mrb[0].mxu0
  %v1032 = vadd.f32 0.0, %v1031
  %v1033 = vpop.f32.mrb[0].mxu0
  %1034 = vmatprep.mubr.f32.mxu0 0.0
  %1035 = vmatmul.mubr.f32.gmra.mrb[0].mxu0 %v911
  %v1036 = vpop.f32.mrb[0].mxu0
  %v1037 = vadd.f32 0.0, %v1036
  %v1038 = vpop.f32.mrb[0].mxu0
  %1039 = vmatprep.mubr.f32.mxu0 0.0
  %1040 = vmatmul.mubr.f32.gmra.mrb[0].mxu0 %v914
  %v1041 = vpop.f32.mrb[0].mxu0
  %v1042 = vadd.f32 0.0, %v1041
  %v1043 = vpop.f32.mrb[0].mxu0
  %1044 = vmatprep.mubr.f32.mxu0 0.0
  %1045 = vmatmul.mubr.f32.gmra.mrb[0].mxu0 %v917
  %v1046 = vpop.f32.mrb[0].mxu0
  %v1047 = vadd.f32 0.0, %v1046
  %v1048 = vpop.f32.mrb[0].mxu0
  %1049 = vmatprep.mubr.f32.mxu0 0.0
  %1050 = vmatmul.mubr.f32.gmra.mrb[0].mxu0 %v920
  %v1051 = vpop.f32.mrb[0].mxu0
  %v1052 = vadd.f32 0.0, %v1051
  %v1053 = vpop.f32.mrb[0].mxu0
  %1054 = vmatprep.mubr.f32.mxu0 0.0
  %1055 = vmatmul.mubr.f32.gmra.mrb[0].mxu0 %v923
  %v1056 = vpop.f32.mrb[0].mxu0
  %v1057 = vadd.f32 0.0, %v1056
  %v1058 = vpop.f32.mrb[0].mxu0
  %1059 = vmatprep.mubr.f32.mxu0 0.0
  %1060 = vmatmul.mubr.f32.gmra.mrb[0].mxu0 %v926
  %v1061 = vpop.f32.mrb[0].mxu0
  %v1062 = vadd.f32 0.0, %v1061
  %v1063 = vpop.f32.mrb[0].mxu0
  %1064 = vmatprep.mubr.f32.mxu0 0.0
  %1065 = vmatmul.mubr.f32.gmra.mrb[0].mxu0 %v929
  %v1066 = vpop.f32.mrb[0].mxu0
  %v1067 = vadd.f32 0.0, %v1066
  %v1068 = vpop.f32.mrb[0].mxu0
  %1069 = vmatprep.mubr.f32.mxu0 0.0
  %1070 = vmatmul.mubr.f32.gmra.mrb[0].mxu0 %v932
  %v1071 = vpop.f32.mrb[0].mxu0
  %v1072 = vadd.f32 0.0, %v1071
  %v1073 = vpop.f32.mrb[0].mxu0
  %1074 = vmatprep.mubr.f32.mxu0 0.0
  %1075 = vmatmul.mubr.f32.gmra.mrb[0].mxu0 %v935
  %v1076 = vpop.f32.mrb[0].mxu0
  %v1077 = vadd.f32 0.0, %v1076
  %v1078 = vpop.f32.mrb[0].mxu0
  %1079 = vmatprep.mubr.f32.mxu0 0.0
  %1080 = vmatmul.mubr.f32.gmra.mrb[0].mxu0 %v938
  %v1081 = vpop.f32.mrb[0].mxu0
  %v1082 = vadd.f32 0.0, %v1081
  %v1083 = vpop.f32.mrb[0].mxu0
  %1084 = vdwg.mxu0
  %v1085 = vld [vmem:[%s3] sm:$0xff]
  %v1086 = vld [vmem:[%s3 + $0x8] sm:$0xff]
  %1087 = vxpose.xlu0.b32.start [1/16] %v1007, 128
  %1088 = vxpose.xlu0.b32.cont [2/16] %v1012, 128
  %1089 = vxpose.xlu0.b32.cont [3/16] 0.0, 128
  %1090 = vxpose.xlu0.b32.cont [4/16] 0.0, 128
  %1091 = vxpose.xlu0.b32.cont [5/16] 0.0, 128
  %1092 = vxpose.xlu0.b32.cont [6/16] 0.0, 128
  %1093 = vxpose.xlu0.b32.cont [7/16] 0.0, 128
  %1094 = vxpose.xlu0.b32.cont [8/16] 0.0, 128
  %1095 = vxpose.xlu0.b32.cont [9/16] 0.0, 128
  %1096 = vxpose.xlu0.b32.cont [10/16] 0.0, 128
  %1097 = vxpose.xlu0.b32.cont [11/16] 0.0, 128
  %1098 = vxpose.xlu0.b32.cont [12/16] 0.0, 128
  %1099 = vxpose.xlu0.b32.cont [13/16] 0.0, 128
  %1100 = vxpose.xlu0.b32.cont [14/16] 0.0, 128
  %1101 = vxpose.xlu0.b32.cont [15/16] 0.0, 128
  %1102 = vxpose.xlu0.b32.end [16/16] 0.0, 128
  %v1103 = vpop.trf.xlu0
  %v1104 = vpop.trf.xlu0
  %v1105 = vpop.trf.xlu0
  %v1106 = vpop.trf.xlu0
  %v1107 = vpop.trf.xlu0
  %v1108 = vpop.trf.xlu0
  %v1109 = vpop.trf.xlu0
  %v1110 = vpop.trf.xlu0
  %v1111 = vpop.trf.xlu0
  %v1112 = vpop.trf.xlu0
  %v1113 = vpop.trf.xlu0
  %v1114 = vpop.trf.xlu0
  %v1115 = vpop.trf.xlu0
  %v1116 = vpop.trf.xlu0
  %v1117 = vpop.trf.xlu0
  %v1118 = vpop.trf.xlu0
  %1119 = vxpose.xlu0.b32.start [1/16] %v1017, 128
  %1120 = vxpose.xlu0.b32.cont [2/16] %v1022, 128
  %1121 = vxpose.xlu0.b32.cont [3/16] 0.0, 128
  %1122 = vxpose.xlu0.b32.cont [4/16] 0.0, 128
  %1123 = vxpose.xlu0.b32.cont [5/16] 0.0, 128
  %1124 = vxpose.xlu0.b32.cont [6/16] 0.0, 128
  %1125 = vxpose.xlu0.b32.cont [7/16] 0.0, 128
  %1126 = vxpose.xlu0.b32.cont [8/16] 0.0, 128
  %1127 = vxpose.xlu0.b32.cont [9/16] 0.0, 128
  %1128 = vxpose.xlu0.b32.cont [10/16] 0.0, 128
  %1129 = vxpose.xlu0.b32.cont [11/16] 0.0, 128
  %1130 = vxpose.xlu0.b32.cont [12/16] 0.0, 128
  %1131 = vxpose.xlu0.b32.cont [13/16] 0.0, 128
  %1132 = vxpose.xlu0.b32.cont [14/16] 0.0, 128
  %1133 = vxpose.xlu0.b32.cont [15/16] 0.0, 128
  %1134 = vxpose.xlu0.b32.end [16/16] 0.0, 128
  %v1135 = vpop.trf.xlu0
  %v1136 = vpop.trf.xlu0
  %v1137 = vpop.trf.xlu0
  %v1138 = vpop.trf.xlu0
  %v1139 = vpop.trf.xlu0
  %v1140 = vpop.trf.xlu0
  %v1141 = vpop.trf.xlu0
  %v1142 = vpop.trf.xlu0
  %v1143 = vpop.trf.xlu0
  %v1144 = vpop.trf.xlu0
  %v1145 = vpop.trf.xlu0
  %v1146 = vpop.trf.xlu0
  %v1147 = vpop.trf.xlu0
  %v1148 = vpop.trf.xlu0
  %v1149 = vpop.trf.xlu0
  %v1150 = vpop.trf.xlu0
  %1151 = vxpose.xlu0.b32.start [1/16] %v1027, 128
  %1152 = vxpose.xlu0.b32.cont [2/16] %v1032, 128
  %1153 = vxpose.xlu0.b32.cont [3/16] 0.0, 128
  %1154 = vxpose.xlu0.b32.cont [4/16] 0.0, 128
  %1155 = vxpose.xlu0.b32.cont [5/16] 0.0, 128
  %1156 = vxpose.xlu0.b32.cont [6/16] 0.0, 128
  %1157 = vxpose.xlu0.b32.cont [7/16] 0.0, 128
  %1158 = vxpose.xlu0.b32.cont [8/16] 0.0, 128
  %1159 = vxpose.xlu0.b32.cont [9/16] 0.0, 128
  %1160 = vxpose.xlu0.b32.cont [10/16] 0.0, 128
  %1161 = vxpose.xlu0.b32.cont [11/16] 0.0, 128
  %1162 = vxpose.xlu0.b32.cont [12/16] 0.0, 128
  %1163 = vxpose.xlu0.b32.cont [13/16] 0.0, 128
  %1164 = vxpose.xlu0.b32.cont [14/16] 0.0, 128
  %1165 = vxpose.xlu0.b32.cont [15/16] 0.0, 128
  %1166 = vxpose.xlu0.b32.end [16/16] 0.0, 128
  %v1167 = vpop.trf.xlu0
  %v1168 = vpop.trf.xlu0
  %v1169 = vpop.trf.xlu0
  %v1170 = vpop.trf.xlu0
  %v1171 = vpop.trf.xlu0
  %v1172 = vpop.trf.xlu0
  %v1173 = vpop.trf.xlu0
  %v1174 = vpop.trf.xlu0
  %v1175 = vpop.trf.xlu0
  %v1176 = vpop.trf.xlu0
  %v1177 = vpop.trf.xlu0
  %v1178 = vpop.trf.xlu0
  %v1179 = vpop.trf.xlu0
  %v1180 = vpop.trf.xlu0
  %v1181 = vpop.trf.xlu0
  %v1182 = vpop.trf.xlu0
  %1183 = vxpose.xlu0.b32.start [1/16] %v1037, 128
  %1184 = vxpose.xlu0.b32.cont [2/16] %v1042, 128
  %1185 = vxpose.xlu0.b32.cont [3/16] 0.0, 128
  %1186 = vxpose.xlu0.b32.cont [4/16] 0.0, 128
  %1187 = vxpose.xlu0.b32.cont [5/16] 0.0, 128
  %1188 = vxpose.xlu0.b32.cont [6/16] 0.0, 128
  %1189 = vxpose.xlu0.b32.cont [7/16] 0.0, 128
  %1190 = vxpose.xlu0.b32.cont [8/16] 0.0, 128
  %1191 = vxpose.xlu0.b32.cont [9/16] 0.0, 128
  %1192 = vxpose.xlu0.b32.cont [10/16] 0.0, 128
  %1193 = vxpose.xlu0.b32.cont [11/16] 0.0, 128
  %1194 = vxpose.xlu0.b32.cont [12/16] 0.0, 128
  %1195 = vxpose.xlu0.b32.cont [13/16] 0.0, 128
  %1196 = vxpose.xlu0.b32.cont [14/16] 0.0, 128
  %1197 = vxpose.xlu0.b32.cont [15/16] 0.0, 128
  %1198 = vxpose.xlu0.b32.end [16/16] 0.0, 128
  %v1199 = vpop.trf.xlu0
  %v1200 = vpop.trf.xlu0
  %v1201 = vpop.trf.xlu0
  %v1202 = vpop.trf.xlu0
  %v1203 = vpop.trf.xlu0
  %v1204 = vpop.trf.xlu0
  %v1205 = vpop.trf.xlu0
  %v1206 = vpop.trf.xlu0
  %v1207 = vpop.trf.xlu0
  %v1208 = vpop.trf.xlu0
  %v1209 = vpop.trf.xlu0
  %v1210 = vpop.trf.xlu0
  %v1211 = vpop.trf.xlu0
  %v1212 = vpop.trf.xlu0
  %v1213 = vpop.trf.xlu0
  %v1214 = vpop.trf.xlu0
  %1215 = vxpose.xlu0.b32.start [1/16] %v1047, 128
  %1216 = vxpose.xlu0.b32.cont [2/16] %v1052, 128
  %1217 = vxpose.xlu0.b32.cont [3/16] 0.0, 128
  %1218 = vxpose.xlu0.b32.cont [4/16] 0.0, 128
  %1219 = vxpose.xlu0.b32.cont [5/16] 0.0, 128
  %1220 = vxpose.xlu0.b32.cont [6/16] 0.0, 128
  %1221 = vxpose.xlu0.b32.cont [7/16] 0.0, 128
  %1222 = vxpose.xlu0.b32.cont [8/16] 0.0, 128
  %1223 = vxpose.xlu0.b32.cont [9/16] 0.0, 128
  %1224 = vxpose.xlu0.b32.cont [10/16] 0.0, 128
  %1225 = vxpose.xlu0.b32.cont [11/16] 0.0, 128
  %1226 = vxpose.xlu0.b32.cont [12/16] 0.0, 128
  %1227 = vxpose.xlu0.b32.cont [13/16] 0.0, 128
  %1228 = vxpose.xlu0.b32.cont [14/16] 0.0, 128
  %1229 = vxpose.xlu0.b32.cont [15/16] 0.0, 128
  %1230 = vxpose.xlu0.b32.end [16/16] 0.0, 128
  %v1231 = vpop.trf.xlu0
  %v1232 = vpop.trf.xlu0
  %v1233 = vpop.trf.xlu0
  %v1234 = vpop.trf.xlu0
  %v1235 = vpop.trf.xlu0
  %v1236 = vpop.trf.xlu0
  %v1237 = vpop.trf.xlu0
  %v1238 = vpop.trf.xlu0
  %v1239 = vpop.trf.xlu0
  %v1240 = vpop.trf.xlu0
  %v1241 = vpop.trf.xlu0
  %v1242 = vpop.trf.xlu0
  %v1243 = vpop.trf.xlu0
  %v1244 = vpop.trf.xlu0
  %v1245 = vpop.trf.xlu0
  %v1246 = vpop.trf.xlu0
  %1247 = vxpose.xlu0.b32.start [1/16] %v1057, 128
  %1248 = vxpose.xlu0.b32.cont [2/16] %v1062, 128
  %1249 = vxpose.xlu0.b32.cont [3/16] 0.0, 128
  %1250 = vxpose.xlu0.b32.cont [4/16] 0.0, 128
  %1251 = vxpose.xlu0.b32.cont [5/16] 0.0, 128
  %1252 = vxpose.xlu0.b32.cont [6/16] 0.0, 128
  %1253 = vxpose.xlu0.b32.cont [7/16] 0.0, 128
  %1254 = vxpose.xlu0.b32.cont [8/16] 0.0, 128
  %1255 = vxpose.xlu0.b32.cont [9/16] 0.0, 128
  %1256 = vxpose.xlu0.b32.cont [10/16] 0.0, 128
  %1257 = vxpose.xlu0.b32.cont [11/16] 0.0, 128
  %1258 = vxpose.xlu0.b32.cont [12/16] 0.0, 128
  %1259 = vxpose.xlu0.b32.cont [13/16] 0.0, 128
  %1260 = vxpose.xlu0.b32.cont [14/16] 0.0, 128
  %1261 = vxpose.xlu0.b32.cont [15/16] 0.0, 128
  %1262 = vxpose.xlu0.b32.end [16/16] 0.0, 128
  %v1263 = vpop.trf.xlu0
  %v1264 = vpop.trf.xlu0
  %v1265 = vpop.trf.xlu0
  %v1266 = vpop.trf.xlu0
  %v1267 = vpop.trf.xlu0
  %v1268 = vpop.trf.xlu0
  %v1269 = vpop.trf.xlu0
  %v1270 = vpop.trf.xlu0
  %v1271 = vpop.trf.xlu0
  %v1272 = vpop.trf.xlu0
  %v1273 = vpop.trf.xlu0
  %v1274 = vpop.trf.xlu0
  %v1275 = vpop.trf.xlu0
  %v1276 = vpop.trf.xlu0
  %v1277 = vpop.trf.xlu0
  %v1278 = vpop.trf.xlu0
  %1279 = vxpose.xlu0.b32.start [1/16] %v1067, 128
  %1280 = vxpose.xlu0.b32.cont [2/16] %v1072, 128
  %1281 = vxpose.xlu0.b32.cont [3/16] 0.0, 128
  %1282 = vxpose.xlu0.b32.cont [4/16] 0.0, 128
  %1283 = vxpose.xlu0.b32.cont [5/16] 0.0, 128
  %1284 = vxpose.xlu0.b32.cont [6/16] 0.0, 128
  %1285 = vxpose.xlu0.b32.cont [7/16] 0.0, 128
  %1286 = vxpose.xlu0.b32.cont [8/16] 0.0, 128
  %1287 = vxpose.xlu0.b32.cont [9/16] 0.0, 128
  %1288 = vxpose.xlu0.b32.cont [10/16] 0.0, 128
  %1289 = vxpose.xlu0.b32.cont [11/16] 0.0, 128
  %1290 = vxpose.xlu0.b32.cont [12/16] 0.0, 128
  %1291 = vxpose.xlu0.b32.cont [13/16] 0.0, 128
  %1292 = vxpose.xlu0.b32.cont [14/16] 0.0, 128
  %1293 = vxpose.xlu0.b32.cont [15/16] 0.0, 128
  %1294 = vxpose.xlu0.b32.end [16/16] 0.0, 128
  %v1295 = vpop.trf.xlu0
  %v1296 = vpop.trf.xlu0
  %v1297 = vpop.trf.xlu0
  %v1298 = vpop.trf.xlu0
  %v1299 = vpop.trf.xlu0
  %v1300 = vpop.trf.xlu0
  %v1301 = vpop.trf.xlu0
  %v1302 = vpop.trf.xlu0
  %v1303 = vpop.trf.xlu0
  %v1304 = vpop.trf.xlu0
  %v1305 = vpop.trf.xlu0
  %v1306 = vpop.trf.xlu0
  %v1307 = vpop.trf.xlu0
  %v1308 = vpop.trf.xlu0
  %v1309 = vpop.trf.xlu0
  %v1310 = vpop.trf.xlu0
  %1311 = vxpose.xlu0.b32.start [1/16] %v1077, 128
  %1312 = vxpose.xlu0.b32.cont [2/16] %v1082, 128
  %1313 = vxpose.xlu0.b32.cont [3/16] 0.0, 128
  %1314 = vxpose.xlu0.b32.cont [4/16] 0.0, 128
  %1315 = vxpose.xlu0.b32.cont [5/16] 0.0, 128
  %1316 = vxpose.xlu0.b32.cont [6/16] 0.0, 128
  %1317 = vxpose.xlu0.b32.cont [7/16] 0.0, 128
  %1318 = vxpose.xlu0.b32.cont [8/16] 0.0, 128
  %1319 = vxpose.xlu0.b32.cont [9/16] 0.0, 128
  %1320 = vxpose.xlu0.b32.cont [10/16] 0.0, 128
  %1321 = vxpose.xlu0.b32.cont [11/16] 0.0, 128
  %1322 = vxpose.xlu0.b32.cont [12/16] 0.0, 128
  %1323 = vxpose.xlu0.b32.cont [13/16] 0.0, 128
  %1324 = vxpose.xlu0.b32.cont [14/16] 0.0, 128
  %1325 = vxpose.xlu0.b32.cont [15/16] 0.0, 128
  %1326 = vxpose.xlu0.b32.end [16/16] 0.0, 128
  %v1327 = vpop.trf.xlu0
  %v1328 = vpop.trf.xlu0
  %v1329 = vpop.trf.xlu0
  %v1330 = vpop.trf.xlu0
  %v1331 = vpop.trf.xlu0
  %v1332 = vpop.trf.xlu0
  %v1333 = vpop.trf.xlu0
  %v1334 = vpop.trf.xlu0
  %v1335 = vpop.trf.xlu0
  %v1336 = vpop.trf.xlu0
  %v1337 = vpop.trf.xlu0
  %v1338 = vpop.trf.xlu0
  %v1339 = vpop.trf.xlu0
  %v1340 = vpop.trf.xlu0
  %v1341 = vpop.trf.xlu0
  %v1342 = vpop.trf.xlu0
  %1359 = vrot.lane.b32.xlu0 %v1007, 112
  %v1360 = vpop.permute.xlu0 %1359
  %1361 = vrot.lane.b32.xlu0 %v1012, 112
  %v1362 = vpop.permute.xlu0 %1361
  %1363 = vrot.lane.b32.xlu0 %v1017, 112
  %v1364 = vpop.permute.xlu0 %1363
  %1365 = vrot.lane.b32.xlu0 %v1022, 112
  %v1366 = vpop.permute.xlu0 %1365
  %1367 = vrot.lane.b32.xlu0 %v1027, 112
  %v1368 = vpop.permute.xlu0 %1367
  %1369 = vrot.lane.b32.xlu0 %v1032, 112
  %v1370 = vpop.permute.xlu0 %1369
  %1371 = vrot.lane.b32.xlu0 %v1037, 112
  %v1372 = vpop.permute.xlu0 %1371
  %1373 = vrot.lane.b32.xlu0 %v1042, 112
  %v1374 = vpop.permute.xlu0 %1373
  %1375 = vrot.lane.b32.xlu0 %v1047, 112
  %v1376 = vpop.permute.xlu0 %1375
  %1377 = vrot.lane.b32.xlu0 %v1052, 112
  %v1378 = vpop.permute.xlu0 %1377
  %1379 = vrot.lane.b32.xlu0 %v1057, 112
  %v1380 = vpop.permute.xlu0 %1379
  %1381 = vrot.lane.b32.xlu0 %v1062, 112
  %v1382 = vpop.permute.xlu0 %1381
  %1383 = vrot.lane.b32.xlu0 %v1067, 112
  %v1384 = vpop.permute.xlu0 %1383
  %1385 = vrot.lane.b32.xlu0 %v1072, 112
  %v1386 = vpop.permute.xlu0 %1385
  %1387 = vrot.lane.b32.xlu0 %v1077, 112
  %v1388 = vpop.permute.xlu0 %1387
  %1389 = vrot.lane.b32.xlu0 %v1082, 112
  %v1390 = vpop.permute.xlu0 %1389
  %1407 = vxpose.xlu0.b32.start [1/16] %v1360, 128
  %1408 = vxpose.xlu0.b32.cont [2/16] %v1362, 128
  %1409 = vxpose.xlu0.b32.cont [3/16] 0.0, 128
  %1410 = vxpose.xlu0.b32.cont [4/16] 0.0, 128
  %1411 = vxpose.xlu0.b32.cont [5/16] 0.0, 128
  %1412 = vxpose.xlu0.b32.cont [6/16] 0.0, 128
  %1413 = vxpose.xlu0.b32.cont [7/16] 0.0, 128
  %1414 = vxpose.xlu0.b32.cont [8/16] 0.0, 128
  %1415 = vxpose.xlu0.b32.cont [9/16] 0.0, 128
  %1416 = vxpose.xlu0.b32.cont [10/16] 0.0, 128
  %1417 = vxpose.xlu0.b32.cont [11/16] 0.0, 128
  %1418 = vxpose.xlu0.b32.cont [12/16] 0.0, 128
  %1419 = vxpose.xlu0.b32.cont [13/16] 0.0, 128
  %1420 = vxpose.xlu0.b32.cont [14/16] 0.0, 128
  %1421 = vxpose.xlu0.b32.cont [15/16] 0.0, 128
  %1422 = vxpose.xlu0.b32.end [16/16] 0.0, 128
  %v1423 = vpop.trf.xlu0
  %v1424 = vpop.trf.xlu0
  %v1425 = vpop.trf.xlu0
  %v1426 = vpop.trf.xlu0
  %v1427 = vpop.trf.xlu0
  %v1428 = vpop.trf.xlu0
  %v1429 = vpop.trf.xlu0
  %v1430 = vpop.trf.xlu0
  %v1431 = vpop.trf.xlu0
  %v1432 = vpop.trf.xlu0
  %v1433 = vpop.trf.xlu0
  %v1434 = vpop.trf.xlu0
  %v1435 = vpop.trf.xlu0
  %v1436 = vpop.trf.xlu0
  %v1437 = vpop.trf.xlu0
  %v1438 = vpop.trf.xlu0
  %1439 = vxpose.xlu0.b32.start [1/16] %v1364, 128
  %1440 = vxpose.xlu0.b32.cont [2/16] %v1366, 128
  %1441 = vxpose.xlu0.b32.cont [3/16] 0.0, 128
  %1442 = vxpose.xlu0.b32.cont [4/16] 0.0, 128
  %1443 = vxpose.xlu0.b32.cont [5/16] 0.0, 128
  %1444 = vxpose.xlu0.b32.cont [6/16] 0.0, 128
  %1445 = vxpose.xlu0.b32.cont [7/16] 0.0, 128
  %1446 = vxpose.xlu0.b32.cont [8/16] 0.0, 128
  %1447 = vxpose.xlu0.b32.cont [9/16] 0.0, 128
  %1448 = vxpose.xlu0.b32.cont [10/16] 0.0, 128
  %1449 = vxpose.xlu0.b32.cont [11/16] 0.0, 128
  %1450 = vxpose.xlu0.b32.cont [12/16] 0.0, 128
  %1451 = vxpose.xlu0.b32.cont [13/16] 0.0, 128
  %1452 = vxpose.xlu0.b32.cont [14/16] 0.0, 128
  %1453 = vxpose.xlu0.b32.cont [15/16] 0.0, 128
  %1454 = vxpose.xlu0.b32.end [16/16] 0.0, 128
  %v1455 = vpop.trf.xlu0
  %v1456 = vpop.trf.xlu0
  %v1457 = vpop.trf.xlu0
  %v1458 = vpop.trf.xlu0
  %v1459 = vpop.trf.xlu0
  %v1460 = vpop.trf.xlu0
  %v1461 = vpop.trf.xlu0
  %v1462 = vpop.trf.xlu0
  %v1463 = vpop.trf.xlu0
  %v1464 = vpop.trf.xlu0
  %v1465 = vpop.trf.xlu0
  %v1466 = vpop.trf.xlu0
  %v1467 = vpop.trf.xlu0
  %v1468 = vpop.trf.xlu0
  %v1469 = vpop.trf.xlu0
  %v1470 = vpop.trf.xlu0
  %1471 = vxpose.xlu0.b32.start [1/16] %v1368, 128
  %1472 = vxpose.xlu0.b32.cont [2/16] %v1370, 128
  %1473 = vxpose.xlu0.b32.cont [3/16] 0.0, 128
  %1474 = vxpose.xlu0.b32.cont [4/16] 0.0, 128
  %1475 = vxpose.xlu0.b32.cont [5/16] 0.0, 128
  %1476 = vxpose.xlu0.b32.cont [6/16] 0.0, 128
  %1477 = vxpose.xlu0.b32.cont [7/16] 0.0, 128
  %1478 = vxpose.xlu0.b32.cont [8/16] 0.0, 128
  %1479 = vxpose.xlu0.b32.cont [9/16] 0.0, 128
  %1480 = vxpose.xlu0.b32.cont [10/16] 0.0, 128
  %1481 = vxpose.xlu0.b32.cont [11/16] 0.0, 128
  %1482 = vxpose.xlu0.b32.cont [12/16] 0.0, 128
  %1483 = vxpose.xlu0.b32.cont [13/16] 0.0, 128
  %1484 = vxpose.xlu0.b32.cont [14/16] 0.0, 128
  %1485 = vxpose.xlu0.b32.cont [15/16] 0.0, 128
  %1486 = vxpose.xlu0.b32.end [16/16] 0.0, 128
  %v1487 = vpop.trf.xlu0
  %v1488 = vpop.trf.xlu0
  %v1489 = vpop.trf.xlu0
  %v1490 = vpop.trf.xlu0
  %v1491 = vpop.trf.xlu0
  %v1492 = vpop.trf.xlu0
  %v1493 = vpop.trf.xlu0
  %v1494 = vpop.trf.xlu0
  %v1495 = vpop.trf.xlu0
  %v1496 = vpop.trf.xlu0
  %v1497 = vpop.trf.xlu0
  %v1498 = vpop.trf.xlu0
  %v1499 = vpop.trf.xlu0
  %v1500 = vpop.trf.xlu0
  %v1501 = vpop.trf.xlu0
  %v1502 = vpop.trf.xlu0
  %1503 = vxpose.xlu0.b32.start [1/16] %v1372, 128
  %1504 = vxpose.xlu0.b32.cont [2/16] %v1374, 128
  %1505 = vxpose.xlu0.b32.cont [3/16] 0.0, 128
  %1506 = vxpose.xlu0.b32.cont [4/16] 0.0, 128
  %1507 = vxpose.xlu0.b32.cont [5/16] 0.0, 128
  %1508 = vxpose.xlu0.b32.cont [6/16] 0.0, 128
  %1509 = vxpose.xlu0.b32.cont [7/16] 0.0, 128
  %1510 = vxpose.xlu0.b32.cont [8/16] 0.0, 128
  %1511 = vxpose.xlu0.b32.cont [9/16] 0.0, 128
  %1512 = vxpose.xlu0.b32.cont [10/16] 0.0, 128
  %1513 = vxpose.xlu0.b32.cont [11/16] 0.0, 128
  %1514 = vxpose.xlu0.b32.cont [12/16] 0.0, 128
  %1515 = vxpose.xlu0.b32.cont [13/16] 0.0, 128
  %1516 = vxpose.xlu0.b32.cont [14/16] 0.0, 128
  %1517 = vxpose.xlu0.b32.cont [15/16] 0.0, 128
  %1518 = vxpose.xlu0.b32.end [16/16] 0.0, 128
  %v1519 = vpop.trf.xlu0
  %v1520 = vpop.trf.xlu0
  %v1521 = vpop.trf.xlu0
  %v1522 = vpop.trf.xlu0
  %v1523 = vpop.trf.xlu0
  %v1524 = vpop.trf.xlu0
  %v1525 = vpop.trf.xlu0
  %v1526 = vpop.trf.xlu0
  %v1527 = vpop.trf.xlu0
  %v1528 = vpop.trf.xlu0
  %v1529 = vpop.trf.xlu0
  %v1530 = vpop.trf.xlu0
  %v1531 = vpop.trf.xlu0
  %v1532 = vpop.trf.xlu0
  %v1533 = vpop.trf.xlu0
  %v1534 = vpop.trf.xlu0
  %1535 = vxpose.xlu0.b32.start [1/16] %v1376, 128
  %1536 = vxpose.xlu0.b32.cont [2/16] %v1378, 128
  %1537 = vxpose.xlu0.b32.cont [3/16] 0.0, 128
  %1538 = vxpose.xlu0.b32.cont [4/16] 0.0, 128
  %1539 = vxpose.xlu0.b32.cont [5/16] 0.0, 128
  %1540 = vxpose.xlu0.b32.cont [6/16] 0.0, 128
  %1541 = vxpose.xlu0.b32.cont [7/16] 0.0, 128
  %1542 = vxpose.xlu0.b32.cont [8/16] 0.0, 128
  %1543 = vxpose.xlu0.b32.cont [9/16] 0.0, 128
  %1544 = vxpose.xlu0.b32.cont [10/16] 0.0, 128
  %1545 = vxpose.xlu0.b32.cont [11/16] 0.0, 128
  %1546 = vxpose.xlu0.b32.cont [12/16] 0.0, 128
  %1547 = vxpose.xlu0.b32.cont [13/16] 0.0, 128
  %1548 = vxpose.xlu0.b32.cont [14/16] 0.0, 128
  %1549 = vxpose.xlu0.b32.cont [15/16] 0.0, 128
  %1550 = vxpose.xlu0.b32.end [16/16] 0.0, 128
  %v1551 = vpop.trf.xlu0
  %v1552 = vpop.trf.xlu0
  %v1553 = vpop.trf.xlu0
  %v1554 = vpop.trf.xlu0
  %v1555 = vpop.trf.xlu0
  %v1556 = vpop.trf.xlu0
  %v1557 = vpop.trf.xlu0
  %v1558 = vpop.trf.xlu0
  %v1559 = vpop.trf.xlu0
  %v1560 = vpop.trf.xlu0
  %v1561 = vpop.trf.xlu0
  %v1562 = vpop.trf.xlu0
  %v1563 = vpop.trf.xlu0
  %v1564 = vpop.trf.xlu0
  %v1565 = vpop.trf.xlu0
  %v1566 = vpop.trf.xlu0
  %1567 = vxpose.xlu0.b32.start [1/16] %v1380, 128
  %1568 = vxpose.xlu0.b32.cont [2/16] %v1382, 128
  %1569 = vxpose.xlu0.b32.cont [3/16] 0.0, 128
  %1570 = vxpose.xlu0.b32.cont [4/16] 0.0, 128
  %1571 = vxpose.xlu0.b32.cont [5/16] 0.0, 128
  %1572 = vxpose.xlu0.b32.cont [6/16] 0.0, 128
  %1573 = vxpose.xlu0.b32.cont [7/16] 0.0, 128
  %1574 = vxpose.xlu0.b32.cont [8/16] 0.0, 128
  %1575 = vxpose.xlu0.b32.cont [9/16] 0.0, 128
  %1576 = vxpose.xlu0.b32.cont [10/16] 0.0, 128
  %1577 = vxpose.xlu0.b32.cont [11/16] 0.0, 128
  %1578 = vxpose.xlu0.b32.cont [12/16] 0.0, 128
  %1579 = vxpose.xlu0.b32.cont [13/16] 0.0, 128
  %1580 = vxpose.xlu0.b32.cont [14/16] 0.0, 128
  %1581 = vxpose.xlu0.b32.cont [15/16] 0.0, 128
  %1582 = vxpose.xlu0.b32.end [16/16] 0.0, 128
  %v1583 = vpop.trf.xlu0
  %v1584 = vpop.trf.xlu0
  %v1585 = vpop.trf.xlu0
  %v1586 = vpop.trf.xlu0
  %v1587 = vpop.trf.xlu0
  %v1588 = vpop.trf.xlu0
  %v1589 = vpop.trf.xlu0
  %v1590 = vpop.trf.xlu0
  %v1591 = vpop.trf.xlu0
  %v1592 = vpop.trf.xlu0
  %v1593 = vpop.trf.xlu0
  %v1594 = vpop.trf.xlu0
  %v1595 = vpop.trf.xlu0
  %v1596 = vpop.trf.xlu0
  %v1597 = vpop.trf.xlu0
  %v1598 = vpop.trf.xlu0
  %1599 = vxpose.xlu0.b32.start [1/16] %v1384, 128
  %1600 = vxpose.xlu0.b32.cont [2/16] %v1386, 128
  %1601 = vxpose.xlu0.b32.cont [3/16] 0.0, 128
  %1602 = vxpose.xlu0.b32.cont [4/16] 0.0, 128
  %1603 = vxpose.xlu0.b32.cont [5/16] 0.0, 128
  %1604 = vxpose.xlu0.b32.cont [6/16] 0.0, 128
  %1605 = vxpose.xlu0.b32.cont [7/16] 0.0, 128
  %1606 = vxpose.xlu0.b32.cont [8/16] 0.0, 128
  %1607 = vxpose.xlu0.b32.cont [9/16] 0.0, 128
  %1608 = vxpose.xlu0.b32.cont [10/16] 0.0, 128
  %1609 = vxpose.xlu0.b32.cont [11/16] 0.0, 128
  %1610 = vxpose.xlu0.b32.cont [12/16] 0.0, 128
  %1611 = vxpose.xlu0.b32.cont [13/16] 0.0, 128
  %1612 = vxpose.xlu0.b32.cont [14/16] 0.0, 128
  %1613 = vxpose.xlu0.b32.cont [15/16] 0.0, 128
  %1614 = vxpose.xlu0.b32.end [16/16] 0.0, 128
  %v1615 = vpop.trf.xlu0
  %v1616 = vpop.trf.xlu0
  %v1617 = vpop.trf.xlu0
  %v1618 = vpop.trf.xlu0
  %v1619 = vpop.trf.xlu0
  %v1620 = vpop.trf.xlu0
  %v1621 = vpop.trf.xlu0
  %v1622 = vpop.trf.xlu0
  %v1623 = vpop.trf.xlu0
  %v1624 = vpop.trf.xlu0
  %v1625 = vpop.trf.xlu0
  %v1626 = vpop.trf.xlu0
  %v1627 = vpop.trf.xlu0
  %v1628 = vpop.trf.xlu0
  %v1629 = vpop.trf.xlu0
  %v1630 = vpop.trf.xlu0
  %1631 = vxpose.xlu0.b32.start [1/16] %v1388, 128
  %1632 = vxpose.xlu0.b32.cont [2/16] %v1390, 128
  %1633 = vxpose.xlu0.b32.cont [3/16] 0.0, 128
  %1634 = vxpose.xlu0.b32.cont [4/16] 0.0, 128
  %1635 = vxpose.xlu0.b32.cont [5/16] 0.0, 128
  %1636 = vxpose.xlu0.b32.cont [6/16] 0.0, 128
  %1637 = vxpose.xlu0.b32.cont [7/16] 0.0, 128
  %1638 = vxpose.xlu0.b32.cont [8/16] 0.0, 128
  %1639 = vxpose.xlu0.b32.cont [9/16] 0.0, 128
  %1640 = vxpose.xlu0.b32.cont [10/16] 0.0, 128
  %1641 = vxpose.xlu0.b32.cont [11/16] 0.0, 128
  %1642 = vxpose.xlu0.b32.cont [12/16] 0.0, 128
  %1643 = vxpose.xlu0.b32.cont [13/16] 0.0, 128
  %1644 = vxpose.xlu0.b32.cont [14/16] 0.0, 128
  %1645 = vxpose.xlu0.b32.cont [15/16] 0.0, 128
  %1646 = vxpose.xlu0.b32.end [16/16] 0.0, 128
  %v1647 = vpop.trf.xlu0
  %v1648 = vpop.trf.xlu0
  %v1649 = vpop.trf.xlu0
  %v1650 = vpop.trf.xlu0
  %v1651 = vpop.trf.xlu0
  %v1652 = vpop.trf.xlu0
  %v1653 = vpop.trf.xlu0
  %v1654 = vpop.trf.xlu0
  %v1655 = vpop.trf.xlu0
  %v1656 = vpop.trf.xlu0
  %v1657 = vpop.trf.xlu0
  %v1658 = vpop.trf.xlu0
  %v1659 = vpop.trf.xlu0
  %v1660 = vpop.trf.xlu0
  %v1661 = vpop.trf.xlu0
  %v1662 = vpop.trf.xlu0
  %v1663 = vmul.f32 %v1103, %v1085
  %v1664 = vmul.f32 %v1104, %v1086
  %v1665 = vmul.f32 %v1135, %v1085
  %v1666 = vmul.f32 %v1136, %v1086
  %v1667 = vmul.f32 %v1167, %v1085
  %v1668 = vmul.f32 %v1168, %v1086
  %v1669 = vmul.f32 %v1199, %v1085
  %v1670 = vmul.f32 %v1200, %v1086
  %v1671 = vmul.f32 %v1231, %v1085
  %v1672 = vmul.f32 %v1232, %v1086
  %v1673 = vmul.f32 %v1263, %v1085
  %v1674 = vmul.f32 %v1264, %v1086
  %v1675 = vmul.f32 %v1295, %v1085
  %v1676 = vmul.f32 %v1296, %v1086
  %v1677 = vmul.f32 %v1327, %v1085
  %v1678 = vmul.f32 %v1328, %v1086
  %1679 = vst.msk [vmem:[%s4] sm:$0xff] %vm871, %v1663
  %1680 = vst.msk [vmem:[%s4 + $0x8] sm:$0xff] %vm871, %v1664
  %1681 = vst.msk [vmem:[%s4 + $0x10] sm:$0xff] %vm871, %v1665
  %1682 = vst.msk [vmem:[%s4 + $0x18] sm:$0xff] %vm871, %v1666
  %1683 = vst.msk [vmem:[%s4 + $0x20] sm:$0xff] %vm871, %v1667
  %1684 = vst.msk [vmem:[%s4 + $0x28] sm:$0xff] %vm871, %v1668
  %1685 = vst.msk [vmem:[%s4 + $0x30] sm:$0xff] %vm871, %v1669
  %1686 = vst.msk [vmem:[%s4 + $0x38] sm:$0xff] %vm871, %v1670
  %1687 = vst.msk [vmem:[%s4 + $0x40] sm:$0xff] %vm871, %v1671
  %1688 = vst.msk [vmem:[%s4 + $0x48] sm:$0xff] %vm871, %v1672
  %1689 = vst.msk [vmem:[%s4 + $0x50] sm:$0xff] %vm871, %v1673
  %1690 = vst.msk [vmem:[%s4 + $0x58] sm:$0xff] %vm871, %v1674
  %1691 = vst.msk [vmem:[%s4 + $0x60] sm:$0xff] %vm871, %v1675
  %1692 = vst.msk [vmem:[%s4 + $0x68] sm:$0xff] %vm871, %v1676
  %1693 = vst.msk [vmem:[%s4 + $0x70] sm:$0xff] %vm871, %v1677
  %1694 = vst.msk [vmem:[%s4 + $0x78] sm:$0xff] %vm871, %v1678
  %v1695 = vmul.f32 %v1423, %v1085
  %v1696 = vmul.f32 %v1424, %v1086
  %v1697 = vmul.f32 %v1455, %v1085
  %v1698 = vmul.f32 %v1456, %v1086
  %v1699 = vmul.f32 %v1487, %v1085
  %v1700 = vmul.f32 %v1488, %v1086
  %v1701 = vmul.f32 %v1519, %v1085
  %v1702 = vmul.f32 %v1520, %v1086
  %v1703 = vmul.f32 %v1551, %v1085
  %v1704 = vmul.f32 %v1552, %v1086
  %v1705 = vmul.f32 %v1583, %v1085
  %v1706 = vmul.f32 %v1584, %v1086
  %v1707 = vmul.f32 %v1615, %v1085
  %v1708 = vmul.f32 %v1616, %v1086
  %v1709 = vmul.f32 %v1647, %v1085
  %v1710 = vmul.f32 %v1648, %v1086
  %1727 = vrot.lane.b32.xlu0 %v1695, 16
  %v1728 = vpop.permute.xlu0 %1727
  %1729 = vrot.lane.b32.xlu0 %v1696, 16
  %v1730 = vpop.permute.xlu0 %1729
  %1731 = vrot.lane.b32.xlu0 %v1697, 16
  %v1732 = vpop.permute.xlu0 %1731
  %1733 = vrot.lane.b32.xlu0 %v1698, 16
  %v1734 = vpop.permute.xlu0 %1733
  %1735 = vrot.lane.b32.xlu0 %v1699, 16
  %v1736 = vpop.permute.xlu0 %1735
  %1737 = vrot.lane.b32.xlu0 %v1700, 16
  %v1738 = vpop.permute.xlu0 %1737
  %1739 = vrot.lane.b32.xlu0 %v1701, 16
  %v1740 = vpop.permute.xlu0 %1739
  %1741 = vrot.lane.b32.xlu0 %v1702, 16
  %v1742 = vpop.permute.xlu0 %1741
  %1743 = vrot.lane.b32.xlu0 %v1703, 16
  %v1744 = vpop.permute.xlu0 %1743
  %1745 = vrot.lane.b32.xlu0 %v1704, 16
  %v1746 = vpop.permute.xlu0 %1745
  %1747 = vrot.lane.b32.xlu0 %v1705, 16
  %v1748 = vpop.permute.xlu0 %1747
  %1749 = vrot.lane.b32.xlu0 %v1706, 16
  %v1750 = vpop.permute.xlu0 %1749
  %1751 = vrot.lane.b32.xlu0 %v1707, 16
  %v1752 = vpop.permute.xlu0 %1751
  %1753 = vrot.lane.b32.xlu0 %v1708, 16
  %v1754 = vpop.permute.xlu0 %1753
  %1755 = vrot.lane.b32.xlu0 %v1709, 16
  %v1756 = vpop.permute.xlu0 %1755
  %1757 = vrot.lane.b32.xlu0 %v1710, 16
  %v1758 = vpop.permute.xlu0 %1757
  %vm1775 = vcmask 261248
  %1776 = vst.msk [vmem:[%s4] sm:$0xff] %vm1775, %v1728
  %1777 = vst.msk [vmem:[%s4 + $0x8] sm:$0xff] %vm1775, %v1730
  %1778 = vst.msk [vmem:[%s4 + $0x10] sm:$0xff] %vm1775, %v1732
  %1779 = vst.msk [vmem:[%s4 + $0x18] sm:$0xff] %vm1775, %v1734
  %1780 = vst.msk [vmem:[%s4 + $0x20] sm:$0xff] %vm1775, %v1736
  %1781 = vst.msk [vmem:[%s4 + $0x28] sm:$0xff] %vm1775, %v1738
  %1782 = vst.msk [vmem:[%s4 + $0x30] sm:$0xff] %vm1775, %v1740
  %1783 = vst.msk [vmem:[%s4 + $0x38] sm:$0xff] %vm1775, %v1742
  %1784 = vst.msk [vmem:[%s4 + $0x40] sm:$0xff] %vm1775, %v1744
  %1785 = vst.msk [vmem:[%s4 + $0x48] sm:$0xff] %vm1775, %v1746
  %1786 = vst.msk [vmem:[%s4 + $0x50] sm:$0xff] %vm1775, %v1748
  %1787 = vst.msk [vmem:[%s4 + $0x58] sm:$0xff] %vm1775, %v1750
  %1788 = vst.msk [vmem:[%s4 + $0x60] sm:$0xff] %vm1775, %v1752
  %1789 = vst.msk [vmem:[%s4 + $0x68] sm:$0xff] %vm1775, %v1754
  %1790 = vst.msk [vmem:[%s4 + $0x70] sm:$0xff] %vm1775, %v1756
  %1791 = vst.msk [vmem:[%s4 + $0x78] sm:$0xff] %vm1775, %v1758
  // Predicated region
  $region18: #{forward_op.1} parent=0 // pred_check
    _
  $region19: #{forward_op.1} parent=0 // pred_check_branch
    %1793 = sbr.rel (0) target = $region21
  $region20: #{forward_op.1} parent=0 // pred_region
    _
  $region21: #{forward_op.1} parent=0 // pred_fallthru
    _
  // Predicated region
  $region22: #{forward_op.1} parent=0 // pred_check
    _
  $region23: #{forward_op.1} parent=0 // pred_check_branch
    %1795 = sbr.rel (0) target = $region25
  $region24: #{forward_op.1} parent=0 // pred_region
    _
  $region25: #{forward_op.1} parent=0 // pred_fallthru
    _

</llo_original>
